<compile_context>
chip_gen: v7x
topology: tpu7x:2x2x1
jax: 0.10.0
libtpu: 0.0.40
codegen_flags: <defaults>
</compile_context>

<pallas_src>
import math

import jax
import jax.numpy as jnp
from jax.experimental import pallas as pl
from jax.experimental.pallas import tpu as pltpu


def _round_up(x, m):
    return ((x + m - 1) // m) * m


def _make_line_kernel(compute_first, compute_second, tb, lag):
    """Build a kernel specialized for (order flags, tile size)."""
    lag = max(1, min(lag, tb))

    def kernel(v_i_ref, v_j_ref, *refs):
        refs = list(refs)
        pos = 0
        # ---- inputs: HBM-resident embedding tables ----
        first_hbm = second_hbm = ctx_hbm = None
        if compute_first:
            first_hbm = refs[pos]; pos += 1
        if compute_second:
            second_hbm, ctx_hbm = refs[pos], refs[pos + 1]; pos += 2
        # ---- outputs: (1, 1, TB) lane-dense score blocks ----
        first_out = second_out = None
        if compute_first:
            first_out = refs[pos]; pos += 1
        if compute_second:
            second_out = refs[pos]; pos += 1
        # ---- scratch: (TB, E) gather buffers + one shared DMA semaphore ----
        fi_buf = fj_buf = si_buf = cj_buf = None
        if compute_first:
            fi_buf, fj_buf = refs[pos], refs[pos + 1]; pos += 2
        if compute_second:
            si_buf, cj_buf = refs[pos], refs[pos + 1]; pos += 2
        sem = refs[pos].at[0]

        base = pl.multiple_of(pl.program_id(0) * tb, tb)

        def issue(b):
            vi = v_i_ref[base + b]
            vj = v_j_ref[base + b]
            if compute_first:
                pltpu.make_async_copy(first_hbm.at[vi], fi_buf.at[b], sem).start()
                pltpu.make_async_copy(first_hbm.at[vj], fj_buf.at[b], sem).start()
            if compute_second:
                pltpu.make_async_copy(second_hbm.at[vi], si_buf.at[b], sem).start()
                pltpu.make_async_copy(ctx_hbm.at[vj], cj_buf.at[b], sem).start()

        def drain(b):
            # wait() only needs the semaphore + the transfer shape; the src slice
            # used at start() time is irrelevant here (all copies are one row).
            if compute_first:
                pltpu.make_async_copy(first_hbm.at[0], fi_buf.at[b], sem).wait()
                pltpu.make_async_copy(first_hbm.at[0], fj_buf.at[b], sem).wait()
            if compute_second:
                pltpu.make_async_copy(second_hbm.at[0], si_buf.at[b], sem).wait()
                pltpu.make_async_copy(ctx_hbm.at[0], cj_buf.at[b], sem).wait()

        # Software-pipelined gather: at most (lag+1) batch elements of row DMAs
        # in flight at a time; all row fetches overlap each other.
        @pl.loop(0, lag)
        def _prime(b):
            issue(b)

        @pl.loop(lag, tb)
        def _steady(b):
            drain(b - lag)
            issue(b)

        @pl.loop(tb - lag, tb)
        def _tail(b):
            drain(b)

        # Fused elementwise multiply + reduce over the embedding dim; result is
        # stored lane-dense (batch on the lane axis of the (1, 1, TB) block).
        if compute_first:
            prod = fi_buf[...].astype(jnp.float32) * fj_buf[...].astype(jnp.float32)
            first_out[...] = jnp.sum(prod, axis=-1).reshape(1, 1, tb)
        if compute_second:
            prod = si_buf[...].astype(jnp.float32) * cj_buf[...].astype(jnp.float32)
            second_out[...] = jnp.sum(prod, axis=-1).reshape(1, 1, tb)

    return kernel


def line_forward(params, v_i, v_j, order="second", block_b=512):
    """Pallas implementation of LINEModel.forward(v_i, v_j)."""
    first_w, second_w, ctx_w = params
    num_nodes, emb = first_w.shape
    assert second_w.shape == (num_nodes, emb) and ctx_w.shape == (num_nodes, emb)

    # Matches the torch module: 'first' -> first only, 'second' -> second only,
    # anything else -> (first, second).
    compute_first = order != "second"
    compute_second = order != "first"

    B = int(v_i.shape[0])
    tb = min(_round_up(int(block_b), 128), _round_up(max(B, 1), 128))
    b_pad = _round_up(B, tb)
    n_tiles = b_pad // tb

    # Clamp (DMA OOB is not runtime-checked) and pad to the tile boundary.
    vi = jnp.clip(jnp.asarray(v_i, jnp.int32), 0, num_nodes - 1)
    vj = jnp.clip(jnp.asarray(v_j, jnp.int32), 0, num_nodes - 1)
    if b_pad != B:
        vi = jnp.pad(vi, (0, b_pad - B))
        vj = jnp.pad(vj, (0, b_pad - B))

    tables, in_specs, scratch = [], [], []
    if compute_first:
        tables.append(first_w)
        in_specs.append(pl.BlockSpec(memory_space=pl.ANY))
        scratch += [pltpu.VMEM((tb, emb), first_w.dtype),
                    pltpu.VMEM((tb, emb), first_w.dtype)]
    if compute_second:
        tables += [second_w, ctx_w]
        in_specs += [pl.BlockSpec(memory_space=pl.ANY),
                     pl.BlockSpec(memory_space=pl.ANY)]
        scratch += [pltpu.VMEM((tb, emb), second_w.dtype),
                    pltpu.VMEM((tb, emb), ctx_w.dtype)]
    scratch.append(pltpu.SemaphoreType.DMA((1,)))

    n_out = int(compute_first) + int(compute_second)
    out_shape = tuple(jax.ShapeDtypeStruct((n_tiles, 1, tb), jnp.float32)
                      for _ in range(n_out))
    out_specs = tuple(pl.BlockSpec((1, 1, tb), lambda t, vi_ref, vj_ref: (t, 0, 0))
                      for _ in range(n_out))

    kernel = _make_line_kernel(compute_first, compute_second, tb, lag=8)

    outs = pl.pallas_call(
        kernel,
        out_shape=out_shape,
        grid_spec=pltpu.PrefetchScalarGridSpec(
            num_scalar_prefetch=2,          # v_i, v_j -> SMEM
            grid=(n_tiles,),
            in_specs=in_specs,
            out_specs=out_specs,
            scratch_shapes=scratch,
        ),
        compiler_params=pltpu.CompilerParams(
            # Batch tiles are independent -> shard across v7x's 2 TensorCores.
            dimension_semantics=("parallel",)),
    )(vi, vj, *tables)

    if not isinstance(outs, (tuple, list)):
        outs = (outs,)
    flat = [o.reshape(b_pad)[:B] for o in outs]

    if order == "first":
        return flat[0]
    elif order == "second":
        return flat[0]
    else:
        return flat[0], flat[1]


def init_line_params(key, num_nodes, embedding_size):
    """Xavier-uniform init, matching nn.init.xavier_uniform_ on (N, E) weights."""
    bound = math.sqrt(6.0 / (num_nodes + embedding_size))
    k1, k2, k3 = jax.random.split(key, 3)
    shape = (num_nodes, embedding_size)
    first_w = jax.random.uniform(k1, shape, jnp.float32, -bound, bound)
    second_w = jax.random.uniform(k2, shape, jnp.float32, -bound, bound)
    ctx_w = jax.random.uniform(k3, shape, jnp.float32, -bound, bound)
    return first_w, second_w, ctx_w


if __name__ == "__main__":
    num_nodes = 64
    embedding_size = 32
    batch = 8

    key = jax.random.PRNGKey(0)
    kp, ki, kj = jax.random.split(key, 3)
    params = init_line_params(kp, num_nodes, embedding_size)
    v_i = jax.random.randint(ki, (batch,), 0, num_nodes, dtype=jnp.int32)
    v_j = jax.random.randint(kj, (batch,), 0, num_nodes, dtype=jnp.int32)

    # Kernel: all three dispatch modes of the module.
    first_order, second_order = line_forward(params, v_i, v_j, order="both")
    second_only = line_forward(params, v_i, v_j, order="second")
    first_only = line_forward(params, v_i, v_j, order="first")
    jax.block_until_ready((first_order, second_order, second_only, first_only))

    # Pure-JAX reference for validation.
    first_w, second_w, ctx_w = params
    ref_first = jnp.sum(first_w[v_i] * first_w[v_j], axis=-1)
    ref_second = jnp.sum(second_w[v_i] * ctx_w[v_j], axis=-1)

    assert first_order.shape == (batch,) and second_order.shape == (batch,)
    assert jnp.allclose(first_order, ref_first, atol=1e-5, rtol=1e-5)
    assert jnp.allclose(second_order, ref_second, atol=1e-5, rtol=1e-5)
    assert jnp.allclose(second_only, ref_second, atol=1e-5, rtol=1e-5)
    assert jnp.allclose(first_only, ref_first, atol=1e-5, rtol=1e-5)

    print("KERNEL_OK")
</pallas_src>

<mosaic_0001>
module attributes {stable_mosaic.version = 11 : i64} {
  func.func @kernel(%arg0: i32, %arg1: memref<128xi32, #tpu.memory_space<smem>>, %arg2: memref<128xi32, #tpu.memory_space<smem>>, %arg3: memref<64x32xf32, #tpu.memory_space<any>>, %arg4: memref<64x32xf32, #tpu.memory_space<any>>, %arg5: memref<64x32xf32, #tpu.memory_space<any>>, %arg6: memref<1x1x128xf32, #tpu.memory_space<vmem>>, %arg7: memref<1x1x128xf32, #tpu.memory_space<vmem>>, %arg8: memref<128x32xf32, #tpu.memory_space<vmem>>, %arg9: memref<128x32xf32, #tpu.memory_space<vmem>>, %arg10: memref<128x32xf32, #tpu.memory_space<vmem>>, %arg11: memref<128x32xf32, #tpu.memory_space<vmem>>, %arg12: memref<1x!tpu.dma_semaphore, #tpu.memory_space<semaphore_mem>>) attributes {dimension_semantics = [#tpu.dimension_semantics<parallel>], iteration_bounds = array<i64: 1>, scalar_prefetch = 2 : i64, scratch_operands = 5 : i64, tpu.core_type = #tpu.core_type<tc>, window_params = [{}, {}, {}, {transform_indices = @transform_3, window_bounds = array<i64: 1, 1, 128>}, {transform_indices = @transform_4, window_bounds = array<i64: 1, 1, 128>}]} {
    %c128_i32 = arith.constant 128 : i32
    %0 = arith.muli %arg0, %c128_i32 : i32
    %1 = tpu.assume_multiple %0, 128 : i32
    %c0_i32 = arith.constant 0 : i32
    %c0_i32_0 = arith.constant 0 : i32
    %c8_i32 = arith.constant 8 : i32
    %2 = arith.addi %c0_i32_0, %c8_i32 : i32
    %c1_i32 = arith.constant 1 : i32
    scf.for %arg13 = %c0_i32_0 to %2 step %c1_i32  : i32 {
      %c1_i32_25 = arith.constant 1 : i32
      %17 = arith.muli %arg13, %c1_i32_25 : i32
      %c0_i32_26 = arith.constant 0 : i32
      %18 = arith.addi %c0_i32_26, %17 : i32
      %19 = arith.addi %1, %18 : i32
      %20 = arith.index_cast %19 : i32 to index
      %21 = memref.load %arg1[%20] : memref<128xi32, #tpu.memory_space<smem>>
      %22 = arith.addi %1, %18 : i32
      %23 = arith.index_cast %22 : i32 to index
      %24 = memref.load %arg2[%23] : memref<128xi32, #tpu.memory_space<smem>>
      %c0_i32_27 = arith.constant 0 : i32
      %25 = tpu.memref_slice %arg3[%21, %c0_i32_27] : memref<64x32xf32, #tpu.memory_space<any>> -> memref<1x32xf32, #tpu.memory_space<any>>
      %26 = tpu.memref_squeeze %25 : memref<1x32xf32, #tpu.memory_space<any>> -> memref<32xf32, #tpu.memory_space<any>>
      %c0_i32_28 = arith.constant 0 : i32
      %27 = tpu.memref_slice %arg8[%18, %c0_i32_28] : memref<128x32xf32, #tpu.memory_space<vmem>> -> memref<1x32xf32, #tpu.memory_space<vmem>>
      %28 = tpu.memref_squeeze %27 : memref<1x32xf32, #tpu.memory_space<vmem>> -> memref<32xf32, #tpu.memory_space<vmem>>
      %29 = tpu.memref_slice %arg12[%c0_i32] : memref<1x!tpu.dma_semaphore, #tpu.memory_space<semaphore_mem>> -> memref<1x!tpu.dma_semaphore, #tpu.memory_space<semaphore_mem>>
      %30 = tpu.memref_squeeze %29 : memref<1x!tpu.dma_semaphore, #tpu.memory_space<semaphore_mem>> -> memref<!tpu.dma_semaphore, #tpu.memory_space<semaphore_mem>>
      tpu.enqueue_dma source(%26 : memref<32xf32, #tpu.memory_space<any>>) target(%28 : memref<32xf32, #tpu.memory_space<vmem>>) target_semaphore(%30 : memref<!tpu.dma_semaphore, #tpu.memory_space<semaphore_mem>>)
      %c0_i32_29 = arith.constant 0 : i32
      %31 = tpu.memref_slice %arg3[%24, %c0_i32_29] : memref<64x32xf32, #tpu.memory_space<any>> -> memref<1x32xf32, #tpu.memory_space<any>>
      %32 = tpu.memref_squeeze %31 : memref<1x32xf32, #tpu.memory_space<any>> -> memref<32xf32, #tpu.memory_space<any>>
      %c0_i32_30 = arith.constant 0 : i32
      %33 = tpu.memref_slice %arg9[%18, %c0_i32_30] : memref<128x32xf32, #tpu.memory_space<vmem>> -> memref<1x32xf32, #tpu.memory_space<vmem>>
      %34 = tpu.memref_squeeze %33 : memref<1x32xf32, #tpu.memory_space<vmem>> -> memref<32xf32, #tpu.memory_space<vmem>>
      %35 = tpu.memref_slice %arg12[%c0_i32] : memref<1x!tpu.dma_semaphore, #tpu.memory_space<semaphore_mem>> -> memref<1x!tpu.dma_semaphore, #tpu.memory_space<semaphore_mem>>
      %36 = tpu.memref_squeeze %35 : memref<1x!tpu.dma_semaphore, #tpu.memory_space<semaphore_mem>> -> memref<!tpu.dma_semaphore, #tpu.memory_space<semaphore_mem>>
      tpu.enqueue_dma source(%32 : memref<32xf32, #tpu.memory_space<any>>) target(%34 : memref<32xf32, #tpu.memory_space<vmem>>) target_semaphore(%36 : memref<!tpu.dma_semaphore, #tpu.memory_space<semaphore_mem>>)
      %c0_i32_31 = arith.constant 0 : i32
      %37 = tpu.memref_slice %arg4[%21, %c0_i32_31] : memref<64x32xf32, #tpu.memory_space<any>> -> memref<1x32xf32, #tpu.memory_space<any>>
      %38 = tpu.memref_squeeze %37 : memref<1x32xf32, #tpu.memory_space<any>> -> memref<32xf32, #tpu.memory_space<any>>
      %c0_i32_32 = arith.constant 0 : i32
      %39 = tpu.memref_slice %arg10[%18, %c0_i32_32] : memref<128x32xf32, #tpu.memory_space<vmem>> -> memref<1x32xf32, #tpu.memory_space<vmem>>
      %40 = tpu.memref_squeeze %39 : memref<1x32xf32, #tpu.memory_space<vmem>> -> memref<32xf32, #tpu.memory_space<vmem>>
      %41 = tpu.memref_slice %arg12[%c0_i32] : memref<1x!tpu.dma_semaphore, #tpu.memory_space<semaphore_mem>> -> memref<1x!tpu.dma_semaphore, #tpu.memory_space<semaphore_mem>>
      %42 = tpu.memref_squeeze %41 : memref<1x!tpu.dma_semaphore, #tpu.memory_space<semaphore_mem>> -> memref<!tpu.dma_semaphore, #tpu.memory_space<semaphore_mem>>
      tpu.enqueue_dma source(%38 : memref<32xf32, #tpu.memory_space<any>>) target(%40 : memref<32xf32, #tpu.memory_space<vmem>>) target_semaphore(%42 : memref<!tpu.dma_semaphore, #tpu.memory_space<semaphore_mem>>)
      %c0_i32_33 = arith.constant 0 : i32
      %43 = tpu.memref_slice %arg5[%24, %c0_i32_33] : memref<64x32xf32, #tpu.memory_space<any>> -> memref<1x32xf32, #tpu.memory_space<any>>
      %44 = tpu.memref_squeeze %43 : memref<1x32xf32, #tpu.memory_space<any>> -> memref<32xf32, #tpu.memory_space<any>>
      %c0_i32_34 = arith.constant 0 : i32
      %45 = tpu.memref_slice %arg11[%18, %c0_i32_34] : memref<128x32xf32, #tpu.memory_space<vmem>> -> memref<1x32xf32, #tpu.memory_space<vmem>>
      %46 = tpu.memref_squeeze %45 : memref<1x32xf32, #tpu.memory_space<vmem>> -> memref<32xf32, #tpu.memory_space<vmem>>
      %47 = tpu.memref_slice %arg12[%c0_i32] : memref<1x!tpu.dma_semaphore, #tpu.memory_space<semaphore_mem>> -> memref<1x!tpu.dma_semaphore, #tpu.memory_space<semaphore_mem>>
      %48 = tpu.memref_squeeze %47 : memref<1x!tpu.dma_semaphore, #tpu.memory_space<semaphore_mem>> -> memref<!tpu.dma_semaphore, #tpu.memory_space<semaphore_mem>>
      tpu.enqueue_dma source(%44 : memref<32xf32, #tpu.memory_space<any>>) target(%46 : memref<32xf32, #tpu.memory_space<vmem>>) target_semaphore(%48 : memref<!tpu.dma_semaphore, #tpu.memory_space<semaphore_mem>>)
    }
    %c8_i32_1 = arith.constant 8 : i32
    %c0_i32_2 = arith.constant 0 : i32
    %c0_i32_3 = arith.constant 0 : i32
    %c120_i32 = arith.constant 120 : i32
    %3 = arith.addi %c0_i32_3, %c120_i32 : i32
    %c1_i32_4 = arith.constant 1 : i32
    scf.for %arg13 = %c0_i32_3 to %3 step %c1_i32_4  : i32 {
      %c1_i32_25 = arith.constant 1 : i32
      %17 = arith.muli %arg13, %c1_i32_25 : i32
      %c8_i32_26 = arith.constant 8 : i32
      %18 = arith.addi %c8_i32_26, %17 : i32
      %c8_i32_27 = arith.constant 8 : i32
      %19 = arith.subi %18, %c8_i32_27 : i32
      %c0_i32_28 = arith.constant 0 : i32
      %c0_i32_29 = arith.constant 0 : i32
      %20 = tpu.memref_slice %arg3[%c0_i32_28, %c0_i32_29] : memref<64x32xf32, #tpu.memory_space<any>> -> memref<1x32xf32, #tpu.memory_space<any>>
      %21 = tpu.memref_squeeze %20 : memref<1x32xf32, #tpu.memory_space<any>> -> memref<32xf32, #tpu.memory_space<any>>
      %c0_i32_30 = arith.constant 0 : i32
      %22 = tpu.memref_slice %arg8[%19, %c0_i32_30] : memref<128x32xf32, #tpu.memory_space<vmem>> -> memref<1x32xf32, #tpu.memory_space<vmem>>
      %23 = tpu.memref_squeeze %22 : memref<1x32xf32, #tpu.memory_space<vmem>> -> memref<32xf32, #tpu.memory_space<vmem>>
      %24 = tpu.memref_slice %arg12[%c0_i32_2] : memref<1x!tpu.dma_semaphore, #tpu.memory_space<semaphore_mem>> -> memref<1x!tpu.dma_semaphore, #tpu.memory_space<semaphore_mem>>
      %25 = tpu.memref_squeeze %24 : memref<1x!tpu.dma_semaphore, #tpu.memory_space<semaphore_mem>> -> memref<!tpu.dma_semaphore, #tpu.memory_space<semaphore_mem>>
      tpu.wait_dma2 semaphore(%25 : memref<!tpu.dma_semaphore, #tpu.memory_space<semaphore_mem>>) src(%21 : memref<32xf32, #tpu.memory_space<any>>) dst(%23 : memref<32xf32, #tpu.memory_space<vmem>>)
      %c0_i32_31 = arith.constant 0 : i32
      %c0_i32_32 = arith.constant 0 : i32
      %26 = tpu.memref_slice %arg3[%c0_i32_31, %c0_i32_32] : memref<64x32xf32, #tpu.memory_space<any>> -> memref<1x32xf32, #tpu.memory_space<any>>
      %27 = tpu.memref_squeeze %26 : memref<1x32xf32, #tpu.memory_space<any>> -> memref<32xf32, #tpu.memory_space<any>>
      %c0_i32_33 = arith.constant 0 : i32
      %28 = tpu.memref_slice %arg9[%19, %c0_i32_33] : memref<128x32xf32, #tpu.memory_space<vmem>> -> memref<1x32xf32, #tpu.memory_space<vmem>>
      %29 = tpu.memref_squeeze %28 : memref<1x32xf32, #tpu.memory_space<vmem>> -> memref<32xf32, #tpu.memory_space<vmem>>
      %30 = tpu.memref_slice %arg12[%c0_i32_2] : memref<1x!tpu.dma_semaphore, #tpu.memory_space<semaphore_mem>> -> memref<1x!tpu.dma_semaphore, #tpu.memory_space<semaphore_mem>>
      %31 = tpu.memref_squeeze %30 : memref<1x!tpu.dma_semaphore, #tpu.memory_space<semaphore_mem>> -> memref<!tpu.dma_semaphore, #tpu.memory_space<semaphore_mem>>
      tpu.wait_dma2 semaphore(%31 : memref<!tpu.dma_semaphore, #tpu.memory_space<semaphore_mem>>) src(%27 : memref<32xf32, #tpu.memory_space<any>>) dst(%29 : memref<32xf32, #tpu.memory_space<vmem>>)
      %c0_i32_34 = arith.constant 0 : i32
      %c0_i32_35 = arith.constant 0 : i32
      %32 = tpu.memref_slice %arg4[%c0_i32_34, %c0_i32_35] : memref<64x32xf32, #tpu.memory_space<any>> -> memref<1x32xf32, #tpu.memory_space<any>>
      %33 = tpu.memref_squeeze %32 : memref<1x32xf32, #tpu.memory_space<any>> -> memref<32xf32, #tpu.memory_space<any>>
      %c0_i32_36 = arith.constant 0 : i32
      %34 = tpu.memref_slice %arg10[%19, %c0_i32_36] : memref<128x32xf32, #tpu.memory_space<vmem>> -> memref<1x32xf32, #tpu.memory_space<vmem>>
      %35 = tpu.memref_squeeze %34 : memref<1x32xf32, #tpu.memory_space<vmem>> -> memref<32xf32, #tpu.memory_space<vmem>>
      %36 = tpu.memref_slice %arg12[%c0_i32_2] : memref<1x!tpu.dma_semaphore, #tpu.memory_space<semaphore_mem>> -> memref<1x!tpu.dma_semaphore, #tpu.memory_space<semaphore_mem>>
      %37 = tpu.memref_squeeze %36 : memref<1x!tpu.dma_semaphore, #tpu.memory_space<semaphore_mem>> -> memref<!tpu.dma_semaphore, #tpu.memory_space<semaphore_mem>>
      tpu.wait_dma2 semaphore(%37 : memref<!tpu.dma_semaphore, #tpu.memory_space<semaphore_mem>>) src(%33 : memref<32xf32, #tpu.memory_space<any>>) dst(%35 : memref<32xf32, #tpu.memory_space<vmem>>)
      %c0_i32_37 = arith.constant 0 : i32
      %c0_i32_38 = arith.constant 0 : i32
      %38 = tpu.memref_slice %arg5[%c0_i32_37, %c0_i32_38] : memref<64x32xf32, #tpu.memory_space<any>> -> memref<1x32xf32, #tpu.memory_space<any>>
      %39 = tpu.memref_squeeze %38 : memref<1x32xf32, #tpu.memory_space<any>> -> memref<32xf32, #tpu.memory_space<any>>
      %c0_i32_39 = arith.constant 0 : i32
      %40 = tpu.memref_slice %arg11[%19, %c0_i32_39] : memref<128x32xf32, #tpu.memory_space<vmem>> -> memref<1x32xf32, #tpu.memory_space<vmem>>
      %41 = tpu.memref_squeeze %40 : memref<1x32xf32, #tpu.memory_space<vmem>> -> memref<32xf32, #tpu.memory_space<vmem>>
      %42 = tpu.memref_slice %arg12[%c0_i32_2] : memref<1x!tpu.dma_semaphore, #tpu.memory_space<semaphore_mem>> -> memref<1x!tpu.dma_semaphore, #tpu.memory_space<semaphore_mem>>
      %43 = tpu.memref_squeeze %42 : memref<1x!tpu.dma_semaphore, #tpu.memory_space<semaphore_mem>> -> memref<!tpu.dma_semaphore, #tpu.memory_space<semaphore_mem>>
      tpu.wait_dma2 semaphore(%43 : memref<!tpu.dma_semaphore, #tpu.memory_space<semaphore_mem>>) src(%39 : memref<32xf32, #tpu.memory_space<any>>) dst(%41 : memref<32xf32, #tpu.memory_space<vmem>>)
      %44 = arith.addi %1, %18 : i32
      %45 = arith.index_cast %44 : i32 to index
      %46 = memref.load %arg1[%45] : memref<128xi32, #tpu.memory_space<smem>>
      %47 = arith.addi %1, %18 : i32
      %48 = arith.index_cast %47 : i32 to index
      %49 = memref.load %arg2[%48] : memref<128xi32, #tpu.memory_space<smem>>
      %c0_i32_40 = arith.constant 0 : i32
      %50 = tpu.memref_slice %arg3[%46, %c0_i32_40] : memref<64x32xf32, #tpu.memory_space<any>> -> memref<1x32xf32, #tpu.memory_space<any>>
      %51 = tpu.memref_squeeze %50 : memref<1x32xf32, #tpu.memory_space<any>> -> memref<32xf32, #tpu.memory_space<any>>
      %c0_i32_41 = arith.constant 0 : i32
      %52 = tpu.memref_slice %arg8[%18, %c0_i32_41] : memref<128x32xf32, #tpu.memory_space<vmem>> -> memref<1x32xf32, #tpu.memory_space<vmem>>
      %53 = tpu.memref_squeeze %52 : memref<1x32xf32, #tpu.memory_space<vmem>> -> memref<32xf32, #tpu.memory_space<vmem>>
      %54 = tpu.memref_slice %arg12[%c0_i32_2] : memref<1x!tpu.dma_semaphore, #tpu.memory_space<semaphore_mem>> -> memref<1x!tpu.dma_semaphore, #tpu.memory_space<semaphore_mem>>
      %55 = tpu.memref_squeeze %54 : memref<1x!tpu.dma_semaphore, #tpu.memory_space<semaphore_mem>> -> memref<!tpu.dma_semaphore, #tpu.memory_space<semaphore_mem>>
      tpu.enqueue_dma source(%51 : memref<32xf32, #tpu.memory_space<any>>) target(%53 : memref<32xf32, #tpu.memory_space<vmem>>) target_semaphore(%55 : memref<!tpu.dma_semaphore, #tpu.memory_space<semaphore_mem>>)
      %c0_i32_42 = arith.constant 0 : i32
      %56 = tpu.memref_slice %arg3[%49, %c0_i32_42] : memref<64x32xf32, #tpu.memory_space<any>> -> memref<1x32xf32, #tpu.memory_space<any>>
      %57 = tpu.memref_squeeze %56 : memref<1x32xf32, #tpu.memory_space<any>> -> memref<32xf32, #tpu.memory_space<any>>
      %c0_i32_43 = arith.constant 0 : i32
      %58 = tpu.memref_slice %arg9[%18, %c0_i32_43] : memref<128x32xf32, #tpu.memory_space<vmem>> -> memref<1x32xf32, #tpu.memory_space<vmem>>
      %59 = tpu.memref_squeeze %58 : memref<1x32xf32, #tpu.memory_space<vmem>> -> memref<32xf32, #tpu.memory_space<vmem>>
      %60 = tpu.memref_slice %arg12[%c0_i32_2] : memref<1x!tpu.dma_semaphore, #tpu.memory_space<semaphore_mem>> -> memref<1x!tpu.dma_semaphore, #tpu.memory_space<semaphore_mem>>
      %61 = tpu.memref_squeeze %60 : memref<1x!tpu.dma_semaphore, #tpu.memory_space<semaphore_mem>> -> memref<!tpu.dma_semaphore, #tpu.memory_space<semaphore_mem>>
      tpu.enqueue_dma source(%57 : memref<32xf32, #tpu.memory_space<any>>) target(%59 : memref<32xf32, #tpu.memory_space<vmem>>) target_semaphore(%61 : memref<!tpu.dma_semaphore, #tpu.memory_space<semaphore_mem>>)
      %c0_i32_44 = arith.constant 0 : i32
      %62 = tpu.memref_slice %arg4[%46, %c0_i32_44] : memref<64x32xf32, #tpu.memory_space<any>> -> memref<1x32xf32, #tpu.memory_space<any>>
      %63 = tpu.memref_squeeze %62 : memref<1x32xf32, #tpu.memory_space<any>> -> memref<32xf32, #tpu.memory_space<any>>
      %c0_i32_45 = arith.constant 0 : i32
      %64 = tpu.memref_slice %arg10[%18, %c0_i32_45] : memref<128x32xf32, #tpu.memory_space<vmem>> -> memref<1x32xf32, #tpu.memory_space<vmem>>
      %65 = tpu.memref_squeeze %64 : memref<1x32xf32, #tpu.memory_space<vmem>> -> memref<32xf32, #tpu.memory_space<vmem>>
      %66 = tpu.memref_slice %arg12[%c0_i32_2] : memref<1x!tpu.dma_semaphore, #tpu.memory_space<semaphore_mem>> -> memref<1x!tpu.dma_semaphore, #tpu.memory_space<semaphore_mem>>
      %67 = tpu.memref_squeeze %66 : memref<1x!tpu.dma_semaphore, #tpu.memory_space<semaphore_mem>> -> memref<!tpu.dma_semaphore, #tpu.memory_space<semaphore_mem>>
      tpu.enqueue_dma source(%63 : memref<32xf32, #tpu.memory_space<any>>) target(%65 : memref<32xf32, #tpu.memory_space<vmem>>) target_semaphore(%67 : memref<!tpu.dma_semaphore, #tpu.memory_space<semaphore_mem>>)
      %c0_i32_46 = arith.constant 0 : i32
      %68 = tpu.memref_slice %arg5[%49, %c0_i32_46] : memref<64x32xf32, #tpu.memory_space<any>> -> memref<1x32xf32, #tpu.memory_space<any>>
      %69 = tpu.memref_squeeze %68 : memref<1x32xf32, #tpu.memory_space<any>> -> memref<32xf32, #tpu.memory_space<any>>
      %c0_i32_47 = arith.constant 0 : i32
      %70 = tpu.memref_slice %arg11[%18, %c0_i32_47] : memref<128x32xf32, #tpu.memory_space<vmem>> -> memref<1x32xf32, #tpu.memory_space<vmem>>
      %71 = tpu.memref_squeeze %70 : memref<1x32xf32, #tpu.memory_space<vmem>> -> memref<32xf32, #tpu.memory_space<vmem>>
      %72 = tpu.memref_slice %arg12[%c0_i32_2] : memref<1x!tpu.dma_semaphore, #tpu.memory_space<semaphore_mem>> -> memref<1x!tpu.dma_semaphore, #tpu.memory_space<semaphore_mem>>
      %73 = tpu.memref_squeeze %72 : memref<1x!tpu.dma_semaphore, #tpu.memory_space<semaphore_mem>> -> memref<!tpu.dma_semaphore, #tpu.memory_space<semaphore_mem>>
      tpu.enqueue_dma source(%69 : memref<32xf32, #tpu.memory_space<any>>) target(%71 : memref<32xf32, #tpu.memory_space<vmem>>) target_semaphore(%73 : memref<!tpu.dma_semaphore, #tpu.memory_space<semaphore_mem>>)
    }
    %c120_i32_5 = arith.constant 120 : i32
    %c0_i32_6 = arith.constant 0 : i32
    %c0_i32_7 = arith.constant 0 : i32
    %c8_i32_8 = arith.constant 8 : i32
    %4 = arith.addi %c0_i32_7, %c8_i32_8 : i32
    %c1_i32_9 = arith.constant 1 : i32
    scf.for %arg13 = %c0_i32_7 to %4 step %c1_i32_9  : i32 {
      %c1_i32_25 = arith.constant 1 : i32
      %17 = arith.muli %arg13, %c1_i32_25 : i32
      %c120_i32_26 = arith.constant 120 : i32
      %18 = arith.addi %c120_i32_26, %17 : i32
      %c0_i32_27 = arith.constant 0 : i32
      %c0_i32_28 = arith.constant 0 : i32
      %19 = tpu.memref_slice %arg3[%c0_i32_27, %c0_i32_28] : memref<64x32xf32, #tpu.memory_space<any>> -> memref<1x32xf32, #tpu.memory_space<any>>
      %20 = tpu.memref_squeeze %19 : memref<1x32xf32, #tpu.memory_space<any>> -> memref<32xf32, #tpu.memory_space<any>>
      %c0_i32_29 = arith.constant 0 : i32
      %21 = tpu.memref_slice %arg8[%18, %c0_i32_29] : memref<128x32xf32, #tpu.memory_space<vmem>> -> memref<1x32xf32, #tpu.memory_space<vmem>>
      %22 = tpu.memref_squeeze %21 : memref<1x32xf32, #tpu.memory_space<vmem>> -> memref<32xf32, #tpu.memory_space<vmem>>
      %23 = tpu.memref_slice %arg12[%c0_i32_6] : memref<1x!tpu.dma_semaphore, #tpu.memory_space<semaphore_mem>> -> memref<1x!tpu.dma_semaphore, #tpu.memory_space<semaphore_mem>>
      %24 = tpu.memref_squeeze %23 : memref<1x!tpu.dma_semaphore, #tpu.memory_space<semaphore_mem>> -> memref<!tpu.dma_semaphore, #tpu.memory_space<semaphore_mem>>
      tpu.wait_dma2 semaphore(%24 : memref<!tpu.dma_semaphore, #tpu.memory_space<semaphore_mem>>) src(%20 : memref<32xf32, #tpu.memory_space<any>>) dst(%22 : memref<32xf32, #tpu.memory_space<vmem>>)
      %c0_i32_30 = arith.constant 0 : i32
      %c0_i32_31 = arith.constant 0 : i32
      %25 = tpu.memref_slice %arg3[%c0_i32_30, %c0_i32_31] : memref<64x32xf32, #tpu.memory_space<any>> -> memref<1x32xf32, #tpu.memory_space<any>>
      %26 = tpu.memref_squeeze %25 : memref<1x32xf32, #tpu.memory_space<any>> -> memref<32xf32, #tpu.memory_space<any>>
      %c0_i32_32 = arith.constant 0 : i32
      %27 = tpu.memref_slice %arg9[%18, %c0_i32_32] : memref<128x32xf32, #tpu.memory_space<vmem>> -> memref<1x32xf32, #tpu.memory_space<vmem>>
      %28 = tpu.memref_squeeze %27 : memref<1x32xf32, #tpu.memory_space<vmem>> -> memref<32xf32, #tpu.memory_space<vmem>>
      %29 = tpu.memref_slice %arg12[%c0_i32_6] : memref<1x!tpu.dma_semaphore, #tpu.memory_space<semaphore_mem>> -> memref<1x!tpu.dma_semaphore, #tpu.memory_space<semaphore_mem>>
      %30 = tpu.memref_squeeze %29 : memref<1x!tpu.dma_semaphore, #tpu.memory_space<semaphore_mem>> -> memref<!tpu.dma_semaphore, #tpu.memory_space<semaphore_mem>>
      tpu.wait_dma2 semaphore(%30 : memref<!tpu.dma_semaphore, #tpu.memory_space<semaphore_mem>>) src(%26 : memref<32xf32, #tpu.memory_space<any>>) dst(%28 : memref<32xf32, #tpu.memory_space<vmem>>)
      %c0_i32_33 = arith.constant 0 : i32
      %c0_i32_34 = arith.constant 0 : i32
      %31 = tpu.memref_slice %arg4[%c0_i32_33, %c0_i32_34] : memref<64x32xf32, #tpu.memory_space<any>> -> memref<1x32xf32, #tpu.memory_space<any>>
      %32 = tpu.memref_squeeze %31 : memref<1x32xf32, #tpu.memory_space<any>> -> memref<32xf32, #tpu.memory_space<any>>
      %c0_i32_35 = arith.constant 0 : i32
      %33 = tpu.memref_slice %arg10[%18, %c0_i32_35] : memref<128x32xf32, #tpu.memory_space<vmem>> -> memref<1x32xf32, #tpu.memory_space<vmem>>
      %34 = tpu.memref_squeeze %33 : memref<1x32xf32, #tpu.memory_space<vmem>> -> memref<32xf32, #tpu.memory_space<vmem>>
      %35 = tpu.memref_slice %arg12[%c0_i32_6] : memref<1x!tpu.dma_semaphore, #tpu.memory_space<semaphore_mem>> -> memref<1x!tpu.dma_semaphore, #tpu.memory_space<semaphore_mem>>
      %36 = tpu.memref_squeeze %35 : memref<1x!tpu.dma_semaphore, #tpu.memory_space<semaphore_mem>> -> memref<!tpu.dma_semaphore, #tpu.memory_space<semaphore_mem>>
      tpu.wait_dma2 semaphore(%36 : memref<!tpu.dma_semaphore, #tpu.memory_space<semaphore_mem>>) src(%32 : memref<32xf32, #tpu.memory_space<any>>) dst(%34 : memref<32xf32, #tpu.memory_space<vmem>>)
      %c0_i32_36 = arith.constant 0 : i32
      %c0_i32_37 = arith.constant 0 : i32
      %37 = tpu.memref_slice %arg5[%c0_i32_36, %c0_i32_37] : memref<64x32xf32, #tpu.memory_space<any>> -> memref<1x32xf32, #tpu.memory_space<any>>
      %38 = tpu.memref_squeeze %37 : memref<1x32xf32, #tpu.memory_space<any>> -> memref<32xf32, #tpu.memory_space<any>>
      %c0_i32_38 = arith.constant 0 : i32
      %39 = tpu.memref_slice %arg11[%18, %c0_i32_38] : memref<128x32xf32, #tpu.memory_space<vmem>> -> memref<1x32xf32, #tpu.memory_space<vmem>>
      %40 = tpu.memref_squeeze %39 : memref<1x32xf32, #tpu.memory_space<vmem>> -> memref<32xf32, #tpu.memory_space<vmem>>
      %41 = tpu.memref_slice %arg12[%c0_i32_6] : memref<1x!tpu.dma_semaphore, #tpu.memory_space<semaphore_mem>> -> memref<1x!tpu.dma_semaphore, #tpu.memory_space<semaphore_mem>>
      %42 = tpu.memref_squeeze %41 : memref<1x!tpu.dma_semaphore, #tpu.memory_space<semaphore_mem>> -> memref<!tpu.dma_semaphore, #tpu.memory_space<semaphore_mem>>
      tpu.wait_dma2 semaphore(%42 : memref<!tpu.dma_semaphore, #tpu.memory_space<semaphore_mem>>) src(%38 : memref<32xf32, #tpu.memory_space<any>>) dst(%40 : memref<32xf32, #tpu.memory_space<vmem>>)
    }
    %c8_i32_10 = arith.constant 8 : i32
    %c0 = arith.constant 0 : index
    %c0_11 = arith.constant 0 : index
    %5 = vector.load %arg8[%c0, %c0_11] : memref<128x32xf32, #tpu.memory_space<vmem>>, vector<128x32xf32>
    %c0_12 = arith.constant 0 : index
    %c0_13 = arith.constant 0 : index
    %6 = vector.load %arg9[%c0_12, %c0_13] : memref<128x32xf32, #tpu.memory_space<vmem>>, vector<128x32xf32>
    %7 = arith.mulf %5, %6 : vector<128x32xf32>
    %cst = arith.constant dense<0.000000e+00> : vector<128xf32>
    %8 = vector.multi_reduction <add>, %7, %cst [1] : vector<128x32xf32> to vector<128xf32>
    %9 = vector.shape_cast %8 : vector<128xf32> to vector<1x1x128xf32>
    %c0_14 = arith.constant 0 : index
    %c0_15 = arith.constant 0 : index
    %c0_16 = arith.constant 0 : index
    %10 = vector.load %arg6[%c0_14, %c0_15, %c0_16] : memref<1x1x128xf32, #tpu.memory_space<vmem>>, vector<1x1x128xf32>
    tpu.vector_store %arg6[%c0_14, %c0_15, %c0_16], %9 {strides = array<i32>} : memref<1x1x128xf32, #tpu.memory_space<vmem>>, vector<1x1x128xf32>,
    %c0_17 = arith.constant 0 : index
    %c0_18 = arith.constant 0 : index
    %11 = vector.load %arg10[%c0_17, %c0_18] : memref<128x32xf32, #tpu.memory_space<vmem>>, vector<128x32xf32>
    %c0_19 = arith.constant 0 : index
    %c0_20 = arith.constant 0 : index
    %12 = vector.load %arg11[%c0_19, %c0_20] : memref<128x32xf32, #tpu.memory_space<vmem>>, vector<128x32xf32>
    %13 = arith.mulf %11, %12 : vector<128x32xf32>
    %cst_21 = arith.constant dense<0.000000e+00> : vector<128xf32>
    %14 = vector.multi_reduction <add>, %13, %cst_21 [1] : vector<128x32xf32> to vector<128xf32>
    %15 = vector.shape_cast %14 : vector<128xf32> to vector<1x1x128xf32>
    %c0_22 = arith.constant 0 : index
    %c0_23 = arith.constant 0 : index
    %c0_24 = arith.constant 0 : index
    %16 = vector.load %arg7[%c0_22, %c0_23, %c0_24] : memref<1x1x128xf32, #tpu.memory_space<vmem>>, vector<1x1x128xf32>
    tpu.vector_store %arg7[%c0_22, %c0_23, %c0_24], %15 {strides = array<i32>} : memref<1x1x128xf32, #tpu.memory_space<vmem>>, vector<1x1x128xf32>,
    return
  }
  func.func @transform_3(%arg0: i32, %arg1: memref<128xi32, #tpu.memory_space<smem>>, %arg2: memref<128xi32, #tpu.memory_space<smem>>) -> (i32, i32, i32) {
    %c0_i32 = arith.constant 0 : i32
    %c0_i32_0 = arith.constant 0 : i32
    %c0_i32_1 = arith.constant 0 : i32
    return %arg0, %c0_i32, %c0_i32_0 : i32, i32, i32
  }
  func.func @transform_4(%arg0: i32, %arg1: memref<128xi32, #tpu.memory_space<smem>>, %arg2: memref<128xi32, #tpu.memory_space<smem>>) -> (i32, i32, i32) {
    %c0_i32 = arith.constant 0 : i32
    %c0_i32_0 = arith.constant 0 : i32
    %c0_i32_1 = arith.constant 0 : i32
    return %arg0, %c0_i32, %c0_i32_0 : i32, i32, i32
  }
}

</mosaic_0001>

<llo_original>
// kernel: tpu_custom_call.1
$region0: #{tpu_custom_call.1}
  #allocation0 [shape = 'u32[]', space=smem, size = 0x4, offset = 0x4, fixed_abs, tag = 'smem constant byte address 0x4 - core index']
  #allocation1 [shape = 'u32[144,128]{1,0:T(1,128)}', space=vmem, size = 0x12000, scoped, tag = 'internal scratch']
  #allocation2 [shape = 'f32[128,32]{1,0:T(8,128)}', space=vmem, size = 0x10000, scoped, tag = 'scratch operand']
  #allocation3 [shape = 'f32[128,32]{1,0:T(8,128)}', space=vmem, size = 0x10000, scoped, tag = 'scratch operand']
  #allocation4 [shape = 'f32[128,32]{1,0:T(8,128)}', space=vmem, size = 0x10000, scoped, tag = 'scratch operand']
  #allocation5 [shape = 'f32[128,32]{1,0:T(8,128)}', space=vmem, size = 0x10000, scoped, tag = 'scratch operand']
  #allocation6 [shape = 's32[1]{0}', space=sflag, size = 0x4, scoped, tag = 'scratch operand']
  #allocation7 [shape = 's32[1]{0}', space=sflag, size = 0x4, scoped, tag = 'scoped memory for tpu_custom_call.1']
  #allocation8 [shape = 'u8[512]{0}', space=smem, size = 0x200, scoped, tag = 'prefetched SMEM operand 0']
  #allocation9 [shape = 'u8[512]{0}', space=smem, size = 0x200, scoped, tag = 'prefetched SMEM operand 1']
  #allocation14 [shape = 's32[]', space=sflag, size = 0x4, offset = 0, fixed_abs, tag = 'sflag constant byte address 0x0 - dummy sync flag']
  #allocation15 [shape = 's32[]', space=sflag, size = 0x4, offset = 0, fixed_abs, tag = 'sflag constant byte address 0x0 - dummy sync flag']
  #allocation16 [shape = 's32[]', space=sflag, size = 0x4, offset = 0, fixed_abs, tag = 'sflag constant byte address 0x0 - dummy sync flag']
  #allocation17 [shape = 's32[]', space=sflag, size = 0x4, offset = 0, fixed_abs, tag = 'sflag constant byte address 0x0 - dummy sync flag']
  #allocation18 [shape = 's32[]', space=sflag, size = 0x4, offset = 0, fixed_abs, tag = 'sflag constant byte address 0x0 - dummy sync flag']
  #allocation19 [shape = 's32[]', space=sflag, size = 0x4, offset = 0, fixed_abs, tag = 'sflag constant byte address 0x0 - dummy sync flag']
  #allocation20 [shape = 's32[]', space=sflag, size = 0x4, offset = 0, fixed_abs, tag = 'sflag constant byte address 0x0 - dummy sync flag']
  #allocation21 [shape = 's32[]', space=sflag, size = 0x4, offset = 0, fixed_abs, tag = 'sflag constant byte address 0x0 - dummy sync flag']
  %s0 = inlined_call_operand.vmem [shape: s32[128], index: 0, kind: input, shape index: {}]
  %s1 = inlined_call_operand.vmem [shape: s32[128], index: 1, kind: input, shape index: {}]
  %s2 = inlined_call_operand.vmem [shape: f32[64,32], index: 2, kind: input, shape index: {}]
  %s3 = inlined_call_operand.vmem [shape: f32[64,32], index: 3, kind: input, shape index: {}]
  %s4 = inlined_call_operand.vmem [shape: f32[64,32], index: 4, kind: input, shape index: {}]
  %s5 = inlined_call_operand.hbm [shape: f32[1,1,128], index: 5, kind: output, shape index: {0}]
  %s6 = inlined_call_operand.hbm [shape: f32[1,1,128], index: 6, kind: output, shape index: {1}]
  %7 = xla_tuple %s5, %s6
  %s8 = sld [smem:[#allocation0]]
  $region279: #{tpu_custom_call.1} parent=0
    _
  %s10 = ssub.s32 1, %s8
  %s11 = scalar_select 0, %s10, %s8
  %s12 = sshll.u32 %s0, 4
  %s13 = int_to_ptr.vmem [resolvable:$true] %s12
  %15 = dma.vmem_to_smem %s13, 16, [#allocation8], [#allocation7]
  %s16 = sshll.u32 %s1, 4
  %s17 = int_to_ptr.vmem [resolvable:$true] %s16
  %19 = dma.vmem_to_smem %s17, 16, [#allocation9], [#allocation7]
  %20 = dma.done [#allocation7], 32
  %21 = sfence
  $region1: #{tpu_custom_call.1} parent=0
    #allocation10 [shape = 'u8[512]{0}', space=vmem, size = 0x400, scoped, tag = 'output window, operand 0, single buffered']
    #allocation11 [shape = 's32[1]{0}', space=sflag, size = 0x4, scoped, tag = 'scoped memory for tpu_custom_call.1']
    #allocation12 [shape = 'u8[512]{0}', space=vmem, size = 0x400, scoped, tag = 'output window, operand 1, single buffered']
    #allocation13 [shape = 's32[1]{0}', space=sflag, size = 0x4, scoped, tag = 'scoped memory for tpu_custom_call.1']
    %22 = vsyncpa [#allocation11], 0
    %23 = vsyncpa [#allocation13], 0
    %s24 = smul.u32 0, 128
    loop: start=0, step=1, limit=8
    $region2: #{tpu_custom_call.1} parent=1 // loop_pre_header
      _
    $region3: #{tpu_custom_call.1} parent=1 // loop_header
      %s26 = sphi 0, %s30
      %p27 = scmp.ge.s32.totalorder %s26, 8
    $region4: #{tpu_custom_call.1} parent=1 // loop_header_branch
      %29 = sbr.rel (%p27) target = $region8
    $region5: #{tpu_custom_call.1} parent=1 // loop_body
      %s31 = sadd.s32 %s24, %s26
      %s32 = sld [smem:[#allocation8 + %s31]]
      %s33 = sld [smem:[#allocation9 + %s31]]
      %s34 = scalar_lea.vmem %s2, %s32
      %s35 = scalar_lea.vmem [#allocation2], %s26
      %p37 = scmp.lt.u32.totalorder 1, 8
      %p38 = pneg %p37
      // Predicated region
      $region9: #{tpu_custom_call.1} parent=5 // pred_check
        _
      $region10: #{tpu_custom_call.1} parent=5 // pred_check_branch
        %40 = sbr.rel (%p37) target = $region12
      $region11: #{tpu_custom_call.1} parent=5 // pred_region
        %s55 = sand.u32 1, 7
        %p56 = scmp.eq.s32.totalorder %s55, 0
        %p57 = pneg %p56
        // Predicated region
        $region24: #{tpu_custom_call.1} parent=11 // pred_check
          _
        $region25: #{tpu_custom_call.1} parent=11 // pred_check_branch
          %59 = sbr.rel (%p56) target = $region27
        $region26: #{tpu_custom_call.1} parent=11 // pred_region
          %s60 = sand.u32 1, 7
          %s61 = ssub.s32 1, %s60
          %s62 = scalar_lea.vmem %s34, %s61
          %s63 = ssub.s32 1, %s60
          %s64 = scalar_lea.vmem %s35, %s63 [#allocation2]
          %s65 = sshllo.u32 0, %s60
          loop: start=0, step=1, limit=1
          $region28: #{tpu_custom_call.1} parent=26 // loop_pre_header
            _
          $region29: #{tpu_custom_call.1} parent=26 // loop_header
            %s67 = sphi 0, %s71
            %p68 = scmp.ge.s32.totalorder %s67, 1
            %s72 = sphi %s62, %s62
            %s73 = sphi %s64, %s64
          $region30: #{tpu_custom_call.1} parent=26 // loop_header_branch
            %70 = sbr.rel (%p68) target = $region34
          $region31: #{tpu_custom_call.1} parent=26 // loop_body
            %v74 = vld [vmem:[%s72] sm:%s65]
            %75 = vst [vmem:[%s73] sm:%s65] %v74
          $region32: #{tpu_custom_call.1} parent=26 // loop_footer
            %s71 = sadd.s32 1, %s67
          $region33: #{tpu_custom_call.1} parent=26 // loop_footer_branch
            %66 = sbr.rel target = $region29
          $region34: #{tpu_custom_call.1} parent=26 // loop_exit
            _
        $region27: #{tpu_custom_call.1} parent=11 // pred_fallthru
          _
      $region12: #{tpu_custom_call.1} parent=5 // pred_fallthru
        _
      // Predicated region
      $region13: #{tpu_custom_call.1} parent=5 // pred_check
        %p41 = pneg %p37
      $region14: #{tpu_custom_call.1} parent=5 // pred_check_branch
        %43 = sbr.rel (%p41) target = $region16
      $region15: #{tpu_custom_call.1} parent=5 // pred_region
        %s44 = sshllo.u32 0, 1
        loop: start=0, step=1, limit=1
        $region17: #{tpu_custom_call.1} parent=15 // loop_pre_header
          _
        $region18: #{tpu_custom_call.1} parent=15 // loop_header
          %s46 = sphi 0, %s50
          %p47 = scmp.ge.s32.totalorder %s46, 1
          %s51 = sphi %s34, %s34
          %s52 = sphi %s35, %s35
        $region19: #{tpu_custom_call.1} parent=15 // loop_header_branch
          %49 = sbr.rel (%p47) target = $region23
        $region20: #{tpu_custom_call.1} parent=15 // loop_body
          %v53 = vld [vmem:[%s51] sm:%s44]
          %54 = vst [vmem:[%s52] sm:%s44] %v53
        $region21: #{tpu_custom_call.1} parent=15 // loop_footer
          %s50 = sadd.s32 1, %s46
        $region22: #{tpu_custom_call.1} parent=15 // loop_footer_branch
          %45 = sbr.rel target = $region18
        $region23: #{tpu_custom_call.1} parent=15 // loop_exit
          _
      $region16: #{tpu_custom_call.1} parent=5 // pred_fallthru
        _
      // Predicated region
      $region35: #{tpu_custom_call.1} parent=5 // pred_check
        _
      $region36: #{tpu_custom_call.1} parent=5 // pred_check_branch
        %78 = sbr.rel (0) target = $region38
      $region37: #{tpu_custom_call.1} parent=5 // pred_region
        %79 = vsyncadd [#allocation6], 16
      $region38: #{tpu_custom_call.1} parent=5 // pred_fallthru
        _
      %s80 = scalar_lea.vmem %s2, %s33
      %s81 = scalar_lea.vmem [#allocation3], %s26
      %p83 = scmp.lt.u32.totalorder 1, 8
      %p84 = pneg %p83
      // Predicated region
      $region39: #{tpu_custom_call.1} parent=5 // pred_check
        _
      $region40: #{tpu_custom_call.1} parent=5 // pred_check_branch
        %86 = sbr.rel (%p83) target = $region42
      $region41: #{tpu_custom_call.1} parent=5 // pred_region
        %s101 = sand.u32 1, 7
        %p102 = scmp.eq.s32.totalorder %s101, 0
        %p103 = pneg %p102
        // Predicated region
        $region54: #{tpu_custom_call.1} parent=41 // pred_check
          _
        $region55: #{tpu_custom_call.1} parent=41 // pred_check_branch
          %105 = sbr.rel (%p102) target = $region57
        $region56: #{tpu_custom_call.1} parent=41 // pred_region
          %s106 = sand.u32 1, 7
          %s107 = ssub.s32 1, %s106
          %s108 = scalar_lea.vmem %s80, %s107
          %s109 = ssub.s32 1, %s106
          %s110 = scalar_lea.vmem %s81, %s109 [#allocation3]
          %s111 = sshllo.u32 0, %s106
          loop: start=0, step=1, limit=1
          $region58: #{tpu_custom_call.1} parent=56 // loop_pre_header
            _
          $region59: #{tpu_custom_call.1} parent=56 // loop_header
            %s113 = sphi 0, %s117
            %p114 = scmp.ge.s32.totalorder %s113, 1
            %s118 = sphi %s108, %s108
            %s119 = sphi %s110, %s110
          $region60: #{tpu_custom_call.1} parent=56 // loop_header_branch
            %116 = sbr.rel (%p114) target = $region64
          $region61: #{tpu_custom_call.1} parent=56 // loop_body
            %v120 = vld [vmem:[%s118] sm:%s111]
            %121 = vst [vmem:[%s119] sm:%s111] %v120
          $region62: #{tpu_custom_call.1} parent=56 // loop_footer
            %s117 = sadd.s32 1, %s113
          $region63: #{tpu_custom_call.1} parent=56 // loop_footer_branch
            %112 = sbr.rel target = $region59
          $region64: #{tpu_custom_call.1} parent=56 // loop_exit
            _
        $region57: #{tpu_custom_call.1} parent=41 // pred_fallthru
          _
      $region42: #{tpu_custom_call.1} parent=5 // pred_fallthru
        _
      // Predicated region
      $region43: #{tpu_custom_call.1} parent=5 // pred_check
        %p87 = pneg %p83
      $region44: #{tpu_custom_call.1} parent=5 // pred_check_branch
        %89 = sbr.rel (%p87) target = $region46
      $region45: #{tpu_custom_call.1} parent=5 // pred_region
        %s90 = sshllo.u32 0, 1
        loop: start=0, step=1, limit=1
        $region47: #{tpu_custom_call.1} parent=45 // loop_pre_header
          _
        $region48: #{tpu_custom_call.1} parent=45 // loop_header
          %s92 = sphi 0, %s96
          %p93 = scmp.ge.s32.totalorder %s92, 1
          %s97 = sphi %s80, %s80
          %s98 = sphi %s81, %s81
        $region49: #{tpu_custom_call.1} parent=45 // loop_header_branch
          %95 = sbr.rel (%p93) target = $region53
        $region50: #{tpu_custom_call.1} parent=45 // loop_body
          %v99 = vld [vmem:[%s97] sm:%s90]
          %100 = vst [vmem:[%s98] sm:%s90] %v99
        $region51: #{tpu_custom_call.1} parent=45 // loop_footer
          %s96 = sadd.s32 1, %s92
        $region52: #{tpu_custom_call.1} parent=45 // loop_footer_branch
          %91 = sbr.rel target = $region48
        $region53: #{tpu_custom_call.1} parent=45 // loop_exit
          _
      $region46: #{tpu_custom_call.1} parent=5 // pred_fallthru
        _
      // Predicated region
      $region65: #{tpu_custom_call.1} parent=5 // pred_check
        _
      $region66: #{tpu_custom_call.1} parent=5 // pred_check_branch
        %124 = sbr.rel (0) target = $region68
      $region67: #{tpu_custom_call.1} parent=5 // pred_region
        %125 = vsyncadd [#allocation6], 16
      $region68: #{tpu_custom_call.1} parent=5 // pred_fallthru
        _
      %s126 = scalar_lea.vmem %s3, %s32
      %s127 = scalar_lea.vmem [#allocation4], %s26
      %p129 = scmp.lt.u32.totalorder 1, 8
      %p130 = pneg %p129
      // Predicated region
      $region69: #{tpu_custom_call.1} parent=5 // pred_check
        _
      $region70: #{tpu_custom_call.1} parent=5 // pred_check_branch
        %132 = sbr.rel (%p129) target = $region72
      $region71: #{tpu_custom_call.1} parent=5 // pred_region
        %s147 = sand.u32 1, 7
        %p148 = scmp.eq.s32.totalorder %s147, 0
        %p149 = pneg %p148
        // Predicated region
        $region84: #{tpu_custom_call.1} parent=71 // pred_check
          _
        $region85: #{tpu_custom_call.1} parent=71 // pred_check_branch
          %151 = sbr.rel (%p148) target = $region87
        $region86: #{tpu_custom_call.1} parent=71 // pred_region
          %s152 = sand.u32 1, 7
          %s153 = ssub.s32 1, %s152
          %s154 = scalar_lea.vmem %s126, %s153
          %s155 = ssub.s32 1, %s152
          %s156 = scalar_lea.vmem %s127, %s155 [#allocation4]
          %s157 = sshllo.u32 0, %s152
          loop: start=0, step=1, limit=1
          $region88: #{tpu_custom_call.1} parent=86 // loop_pre_header
            _
          $region89: #{tpu_custom_call.1} parent=86 // loop_header
            %s159 = sphi 0, %s163
            %p160 = scmp.ge.s32.totalorder %s159, 1
            %s164 = sphi %s154, %s154
            %s165 = sphi %s156, %s156
          $region90: #{tpu_custom_call.1} parent=86 // loop_header_branch
            %162 = sbr.rel (%p160) target = $region94
          $region91: #{tpu_custom_call.1} parent=86 // loop_body
            %v166 = vld [vmem:[%s164] sm:%s157]
            %167 = vst [vmem:[%s165] sm:%s157] %v166
          $region92: #{tpu_custom_call.1} parent=86 // loop_footer
            %s163 = sadd.s32 1, %s159
          $region93: #{tpu_custom_call.1} parent=86 // loop_footer_branch
            %158 = sbr.rel target = $region89
          $region94: #{tpu_custom_call.1} parent=86 // loop_exit
            _
        $region87: #{tpu_custom_call.1} parent=71 // pred_fallthru
          _
      $region72: #{tpu_custom_call.1} parent=5 // pred_fallthru
        _
      // Predicated region
      $region73: #{tpu_custom_call.1} parent=5 // pred_check
        %p133 = pneg %p129
      $region74: #{tpu_custom_call.1} parent=5 // pred_check_branch
        %135 = sbr.rel (%p133) target = $region76
      $region75: #{tpu_custom_call.1} parent=5 // pred_region
        %s136 = sshllo.u32 0, 1
        loop: start=0, step=1, limit=1
        $region77: #{tpu_custom_call.1} parent=75 // loop_pre_header
          _
        $region78: #{tpu_custom_call.1} parent=75 // loop_header
          %s138 = sphi 0, %s142
          %p139 = scmp.ge.s32.totalorder %s138, 1
          %s143 = sphi %s126, %s126
          %s144 = sphi %s127, %s127
        $region79: #{tpu_custom_call.1} parent=75 // loop_header_branch
          %141 = sbr.rel (%p139) target = $region83
        $region80: #{tpu_custom_call.1} parent=75 // loop_body
          %v145 = vld [vmem:[%s143] sm:%s136]
          %146 = vst [vmem:[%s144] sm:%s136] %v145
        $region81: #{tpu_custom_call.1} parent=75 // loop_footer
          %s142 = sadd.s32 1, %s138
        $region82: #{tpu_custom_call.1} parent=75 // loop_footer_branch
          %137 = sbr.rel target = $region78
        $region83: #{tpu_custom_call.1} parent=75 // loop_exit
          _
      $region76: #{tpu_custom_call.1} parent=5 // pred_fallthru
        _
      // Predicated region
      $region95: #{tpu_custom_call.1} parent=5 // pred_check
        _
      $region96: #{tpu_custom_call.1} parent=5 // pred_check_branch
        %170 = sbr.rel (0) target = $region98
      $region97: #{tpu_custom_call.1} parent=5 // pred_region
        %171 = vsyncadd [#allocation6], 16
      $region98: #{tpu_custom_call.1} parent=5 // pred_fallthru
        _
      %s172 = scalar_lea.vmem %s4, %s33
      %s173 = scalar_lea.vmem [#allocation5], %s26
      %p175 = scmp.lt.u32.totalorder 1, 8
      %p176 = pneg %p175
      // Predicated region
      $region99: #{tpu_custom_call.1} parent=5 // pred_check
        _
      $region100: #{tpu_custom_call.1} parent=5 // pred_check_branch
        %178 = sbr.rel (%p175) target = $region102
      $region101: #{tpu_custom_call.1} parent=5 // pred_region
        %s193 = sand.u32 1, 7
        %p194 = scmp.eq.s32.totalorder %s193, 0
        %p195 = pneg %p194
        // Predicated region
        $region114: #{tpu_custom_call.1} parent=101 // pred_check
          _
        $region115: #{tpu_custom_call.1} parent=101 // pred_check_branch
          %197 = sbr.rel (%p194) target = $region117
        $region116: #{tpu_custom_call.1} parent=101 // pred_region
          %s198 = sand.u32 1, 7
          %s199 = ssub.s32 1, %s198
          %s200 = scalar_lea.vmem %s172, %s199
          %s201 = ssub.s32 1, %s198
          %s202 = scalar_lea.vmem %s173, %s201 [#allocation5]
          %s203 = sshllo.u32 0, %s198
          loop: start=0, step=1, limit=1
          $region118: #{tpu_custom_call.1} parent=116 // loop_pre_header
            _
          $region119: #{tpu_custom_call.1} parent=116 // loop_header
            %s205 = sphi 0, %s209
            %p206 = scmp.ge.s32.totalorder %s205, 1
            %s210 = sphi %s200, %s200
            %s211 = sphi %s202, %s202
          $region120: #{tpu_custom_call.1} parent=116 // loop_header_branch
            %208 = sbr.rel (%p206) target = $region124
          $region121: #{tpu_custom_call.1} parent=116 // loop_body
            %v212 = vld [vmem:[%s210] sm:%s203]
            %213 = vst [vmem:[%s211] sm:%s203] %v212
          $region122: #{tpu_custom_call.1} parent=116 // loop_footer
            %s209 = sadd.s32 1, %s205
          $region123: #{tpu_custom_call.1} parent=116 // loop_footer_branch
            %204 = sbr.rel target = $region119
          $region124: #{tpu_custom_call.1} parent=116 // loop_exit
            _
        $region117: #{tpu_custom_call.1} parent=101 // pred_fallthru
          _
      $region102: #{tpu_custom_call.1} parent=5 // pred_fallthru
        _
      // Predicated region
      $region103: #{tpu_custom_call.1} parent=5 // pred_check
        %p179 = pneg %p175
      $region104: #{tpu_custom_call.1} parent=5 // pred_check_branch
        %181 = sbr.rel (%p179) target = $region106
      $region105: #{tpu_custom_call.1} parent=5 // pred_region
        %s182 = sshllo.u32 0, 1
        loop: start=0, step=1, limit=1
        $region107: #{tpu_custom_call.1} parent=105 // loop_pre_header
          _
        $region108: #{tpu_custom_call.1} parent=105 // loop_header
          %s184 = sphi 0, %s188
          %p185 = scmp.ge.s32.totalorder %s184, 1
          %s189 = sphi %s172, %s172
          %s190 = sphi %s173, %s173
        $region109: #{tpu_custom_call.1} parent=105 // loop_header_branch
          %187 = sbr.rel (%p185) target = $region113
        $region110: #{tpu_custom_call.1} parent=105 // loop_body
          %v191 = vld [vmem:[%s189] sm:%s182]
          %192 = vst [vmem:[%s190] sm:%s182] %v191
        $region111: #{tpu_custom_call.1} parent=105 // loop_footer
          %s188 = sadd.s32 1, %s184
        $region112: #{tpu_custom_call.1} parent=105 // loop_footer_branch
          %183 = sbr.rel target = $region108
        $region113: #{tpu_custom_call.1} parent=105 // loop_exit
          _
      $region106: #{tpu_custom_call.1} parent=5 // pred_fallthru
        _
      // Predicated region
      $region125: #{tpu_custom_call.1} parent=5 // pred_check
        _
      $region126: #{tpu_custom_call.1} parent=5 // pred_check_branch
        %216 = sbr.rel (0) target = $region128
      $region127: #{tpu_custom_call.1} parent=5 // pred_region
        %217 = vsyncadd [#allocation6], 16
      $region128: #{tpu_custom_call.1} parent=5 // pred_fallthru
        _
    $region6: #{tpu_custom_call.1} parent=1 // loop_footer
      %s30 = sadd.s32 1, %s26
    $region7: #{tpu_custom_call.1} parent=1 // loop_footer_branch
      %25 = sbr.rel target = $region3
    $region8: #{tpu_custom_call.1} parent=1 // loop_exit
      _
    loop: start=0, step=1, limit=120
    $region129: #{tpu_custom_call.1} parent=1 // loop_pre_header
      _
    $region130: #{tpu_custom_call.1} parent=1 // loop_header
      %s219 = sphi 0, %s223
      %p220 = scmp.ge.s32.totalorder %s219, 120
    $region131: #{tpu_custom_call.1} parent=1 // loop_header_branch
      %222 = sbr.rel (%p220) target = $region135
    $region132: #{tpu_custom_call.1} parent=1 // loop_body
      %s224 = sadd.s32 %s219, 8
      %226 = dma.done [#allocation6], 16
      %228 = dma.done [#allocation6], 16
      %230 = dma.done [#allocation6], 16
      %232 = dma.done [#allocation6], 16
      %s233 = sadd.s32 %s24, %s224
      %s234 = sld [smem:[#allocation8 + %s233]]
      %s235 = sld [smem:[#allocation9 + %s233]]
      %s236 = scalar_lea.vmem %s2, %s234
      %s237 = scalar_lea.vmem [#allocation2], %s224
      %p239 = scmp.lt.u32.totalorder 1, 8
      %p240 = pneg %p239
      // Predicated region
      $region136: #{tpu_custom_call.1} parent=132 // pred_check
        _
      $region137: #{tpu_custom_call.1} parent=132 // pred_check_branch
        %242 = sbr.rel (%p239) target = $region139
      $region138: #{tpu_custom_call.1} parent=132 // pred_region
        %s257 = sand.u32 1, 7
        %p258 = scmp.eq.s32.totalorder %s257, 0
        %p259 = pneg %p258
        // Predicated region
        $region151: #{tpu_custom_call.1} parent=138 // pred_check
          _
        $region152: #{tpu_custom_call.1} parent=138 // pred_check_branch
          %261 = sbr.rel (%p258) target = $region154
        $region153: #{tpu_custom_call.1} parent=138 // pred_region
          %s262 = sand.u32 1, 7
          %s263 = ssub.s32 1, %s262
          %s264 = scalar_lea.vmem %s236, %s263
          %s265 = ssub.s32 1, %s262
          %s266 = scalar_lea.vmem %s237, %s265 [#allocation2]
          %s267 = sshllo.u32 0, %s262
          loop: start=0, step=1, limit=1
          $region155: #{tpu_custom_call.1} parent=153 // loop_pre_header
            _
          $region156: #{tpu_custom_call.1} parent=153 // loop_header
            %s269 = sphi 0, %s273
            %p270 = scmp.ge.s32.totalorder %s269, 1
            %s274 = sphi %s264, %s264
            %s275 = sphi %s266, %s266
          $region157: #{tpu_custom_call.1} parent=153 // loop_header_branch
            %272 = sbr.rel (%p270) target = $region161
          $region158: #{tpu_custom_call.1} parent=153 // loop_body
            %v276 = vld [vmem:[%s274] sm:%s267]
            %277 = vst [vmem:[%s275] sm:%s267] %v276
          $region159: #{tpu_custom_call.1} parent=153 // loop_footer
            %s273 = sadd.s32 1, %s269
          $region160: #{tpu_custom_call.1} parent=153 // loop_footer_branch
            %268 = sbr.rel target = $region156
          $region161: #{tpu_custom_call.1} parent=153 // loop_exit
            _
        $region154: #{tpu_custom_call.1} parent=138 // pred_fallthru
          _
      $region139: #{tpu_custom_call.1} parent=132 // pred_fallthru
        _
      // Predicated region
      $region140: #{tpu_custom_call.1} parent=132 // pred_check
        %p243 = pneg %p239
      $region141: #{tpu_custom_call.1} parent=132 // pred_check_branch
        %245 = sbr.rel (%p243) target = $region143
      $region142: #{tpu_custom_call.1} parent=132 // pred_region
        %s246 = sshllo.u32 0, 1
        loop: start=0, step=1, limit=1
        $region144: #{tpu_custom_call.1} parent=142 // loop_pre_header
          _
        $region145: #{tpu_custom_call.1} parent=142 // loop_header
          %s248 = sphi 0, %s252
          %p249 = scmp.ge.s32.totalorder %s248, 1
          %s253 = sphi %s236, %s236
          %s254 = sphi %s237, %s237
        $region146: #{tpu_custom_call.1} parent=142 // loop_header_branch
          %251 = sbr.rel (%p249) target = $region150
        $region147: #{tpu_custom_call.1} parent=142 // loop_body
          %v255 = vld [vmem:[%s253] sm:%s246]
          %256 = vst [vmem:[%s254] sm:%s246] %v255
        $region148: #{tpu_custom_call.1} parent=142 // loop_footer
          %s252 = sadd.s32 1, %s248
        $region149: #{tpu_custom_call.1} parent=142 // loop_footer_branch
          %247 = sbr.rel target = $region145
        $region150: #{tpu_custom_call.1} parent=142 // loop_exit
          _
      $region143: #{tpu_custom_call.1} parent=132 // pred_fallthru
        _
      // Predicated region
      $region162: #{tpu_custom_call.1} parent=132 // pred_check
        _
      $region163: #{tpu_custom_call.1} parent=132 // pred_check_branch
        %280 = sbr.rel (0) target = $region165
      $region164: #{tpu_custom_call.1} parent=132 // pred_region
        %281 = vsyncadd [#allocation6], 16
      $region165: #{tpu_custom_call.1} parent=132 // pred_fallthru
        _
      %s282 = scalar_lea.vmem %s2, %s235
      %s283 = scalar_lea.vmem [#allocation3], %s224
      %p285 = scmp.lt.u32.totalorder 1, 8
      %p286 = pneg %p285
      // Predicated region
      $region166: #{tpu_custom_call.1} parent=132 // pred_check
        _
      $region167: #{tpu_custom_call.1} parent=132 // pred_check_branch
        %288 = sbr.rel (%p285) target = $region169
      $region168: #{tpu_custom_call.1} parent=132 // pred_region
        %s303 = sand.u32 1, 7
        %p304 = scmp.eq.s32.totalorder %s303, 0
        %p305 = pneg %p304
        // Predicated region
        $region181: #{tpu_custom_call.1} parent=168 // pred_check
          _
        $region182: #{tpu_custom_call.1} parent=168 // pred_check_branch
          %307 = sbr.rel (%p304) target = $region184
        $region183: #{tpu_custom_call.1} parent=168 // pred_region
          %s308 = sand.u32 1, 7
          %s309 = ssub.s32 1, %s308
          %s310 = scalar_lea.vmem %s282, %s309
          %s311 = ssub.s32 1, %s308
          %s312 = scalar_lea.vmem %s283, %s311 [#allocation3]
          %s313 = sshllo.u32 0, %s308
          loop: start=0, step=1, limit=1
          $region185: #{tpu_custom_call.1} parent=183 // loop_pre_header
            _
          $region186: #{tpu_custom_call.1} parent=183 // loop_header
            %s315 = sphi 0, %s319
            %p316 = scmp.ge.s32.totalorder %s315, 1
            %s320 = sphi %s310, %s310
            %s321 = sphi %s312, %s312
          $region187: #{tpu_custom_call.1} parent=183 // loop_header_branch
            %318 = sbr.rel (%p316) target = $region191
          $region188: #{tpu_custom_call.1} parent=183 // loop_body
            %v322 = vld [vmem:[%s320] sm:%s313]
            %323 = vst [vmem:[%s321] sm:%s313] %v322
          $region189: #{tpu_custom_call.1} parent=183 // loop_footer
            %s319 = sadd.s32 1, %s315
          $region190: #{tpu_custom_call.1} parent=183 // loop_footer_branch
            %314 = sbr.rel target = $region186
          $region191: #{tpu_custom_call.1} parent=183 // loop_exit
            _
        $region184: #{tpu_custom_call.1} parent=168 // pred_fallthru
          _
      $region169: #{tpu_custom_call.1} parent=132 // pred_fallthru
        _
      // Predicated region
      $region170: #{tpu_custom_call.1} parent=132 // pred_check
        %p289 = pneg %p285
      $region171: #{tpu_custom_call.1} parent=132 // pred_check_branch
        %291 = sbr.rel (%p289) target = $region173
      $region172: #{tpu_custom_call.1} parent=132 // pred_region
        %s292 = sshllo.u32 0, 1
        loop: start=0, step=1, limit=1
        $region174: #{tpu_custom_call.1} parent=172 // loop_pre_header
          _
        $region175: #{tpu_custom_call.1} parent=172 // loop_header
          %s294 = sphi 0, %s298
          %p295 = scmp.ge.s32.totalorder %s294, 1
          %s299 = sphi %s282, %s282
          %s300 = sphi %s283, %s283
        $region176: #{tpu_custom_call.1} parent=172 // loop_header_branch
          %297 = sbr.rel (%p295) target = $region180
        $region177: #{tpu_custom_call.1} parent=172 // loop_body
          %v301 = vld [vmem:[%s299] sm:%s292]
          %302 = vst [vmem:[%s300] sm:%s292] %v301
        $region178: #{tpu_custom_call.1} parent=172 // loop_footer
          %s298 = sadd.s32 1, %s294
        $region179: #{tpu_custom_call.1} parent=172 // loop_footer_branch
          %293 = sbr.rel target = $region175
        $region180: #{tpu_custom_call.1} parent=172 // loop_exit
          _
      $region173: #{tpu_custom_call.1} parent=132 // pred_fallthru
        _
      // Predicated region
      $region192: #{tpu_custom_call.1} parent=132 // pred_check
        _
      $region193: #{tpu_custom_call.1} parent=132 // pred_check_branch
        %326 = sbr.rel (0) target = $region195
      $region194: #{tpu_custom_call.1} parent=132 // pred_region
        %327 = vsyncadd [#allocation6], 16
      $region195: #{tpu_custom_call.1} parent=132 // pred_fallthru
        _
      %s328 = scalar_lea.vmem %s3, %s234
      %s329 = scalar_lea.vmem [#allocation4], %s224
      %p331 = scmp.lt.u32.totalorder 1, 8
      %p332 = pneg %p331
      // Predicated region
      $region196: #{tpu_custom_call.1} parent=132 // pred_check
        _
      $region197: #{tpu_custom_call.1} parent=132 // pred_check_branch
        %334 = sbr.rel (%p331) target = $region199
      $region198: #{tpu_custom_call.1} parent=132 // pred_region
        %s349 = sand.u32 1, 7
        %p350 = scmp.eq.s32.totalorder %s349, 0
        %p351 = pneg %p350
        // Predicated region
        $region211: #{tpu_custom_call.1} parent=198 // pred_check
          _
        $region212: #{tpu_custom_call.1} parent=198 // pred_check_branch
          %353 = sbr.rel (%p350) target = $region214
        $region213: #{tpu_custom_call.1} parent=198 // pred_region
          %s354 = sand.u32 1, 7
          %s355 = ssub.s32 1, %s354
          %s356 = scalar_lea.vmem %s328, %s355
          %s357 = ssub.s32 1, %s354
          %s358 = scalar_lea.vmem %s329, %s357 [#allocation4]
          %s359 = sshllo.u32 0, %s354
          loop: start=0, step=1, limit=1
          $region215: #{tpu_custom_call.1} parent=213 // loop_pre_header
            _
          $region216: #{tpu_custom_call.1} parent=213 // loop_header
            %s361 = sphi 0, %s365
            %p362 = scmp.ge.s32.totalorder %s361, 1
            %s366 = sphi %s356, %s356
            %s367 = sphi %s358, %s358
          $region217: #{tpu_custom_call.1} parent=213 // loop_header_branch
            %364 = sbr.rel (%p362) target = $region221
          $region218: #{tpu_custom_call.1} parent=213 // loop_body
            %v368 = vld [vmem:[%s366] sm:%s359]
            %369 = vst [vmem:[%s367] sm:%s359] %v368
          $region219: #{tpu_custom_call.1} parent=213 // loop_footer
            %s365 = sadd.s32 1, %s361
          $region220: #{tpu_custom_call.1} parent=213 // loop_footer_branch
            %360 = sbr.rel target = $region216
          $region221: #{tpu_custom_call.1} parent=213 // loop_exit
            _
        $region214: #{tpu_custom_call.1} parent=198 // pred_fallthru
          _
      $region199: #{tpu_custom_call.1} parent=132 // pred_fallthru
        _
      // Predicated region
      $region200: #{tpu_custom_call.1} parent=132 // pred_check
        %p335 = pneg %p331
      $region201: #{tpu_custom_call.1} parent=132 // pred_check_branch
        %337 = sbr.rel (%p335) target = $region203
      $region202: #{tpu_custom_call.1} parent=132 // pred_region
        %s338 = sshllo.u32 0, 1
        loop: start=0, step=1, limit=1
        $region204: #{tpu_custom_call.1} parent=202 // loop_pre_header
          _
        $region205: #{tpu_custom_call.1} parent=202 // loop_header
          %s340 = sphi 0, %s344
          %p341 = scmp.ge.s32.totalorder %s340, 1
          %s345 = sphi %s328, %s328
          %s346 = sphi %s329, %s329
        $region206: #{tpu_custom_call.1} parent=202 // loop_header_branch
          %343 = sbr.rel (%p341) target = $region210
        $region207: #{tpu_custom_call.1} parent=202 // loop_body
          %v347 = vld [vmem:[%s345] sm:%s338]
          %348 = vst [vmem:[%s346] sm:%s338] %v347
        $region208: #{tpu_custom_call.1} parent=202 // loop_footer
          %s344 = sadd.s32 1, %s340
        $region209: #{tpu_custom_call.1} parent=202 // loop_footer_branch
          %339 = sbr.rel target = $region205
        $region210: #{tpu_custom_call.1} parent=202 // loop_exit
          _
      $region203: #{tpu_custom_call.1} parent=132 // pred_fallthru
        _
      // Predicated region
      $region222: #{tpu_custom_call.1} parent=132 // pred_check
        _
      $region223: #{tpu_custom_call.1} parent=132 // pred_check_branch
        %372 = sbr.rel (0) target = $region225
      $region224: #{tpu_custom_call.1} parent=132 // pred_region
        %373 = vsyncadd [#allocation6], 16
      $region225: #{tpu_custom_call.1} parent=132 // pred_fallthru
        _
      %s374 = scalar_lea.vmem %s4, %s235
      %s375 = scalar_lea.vmem [#allocation5], %s224
      %p377 = scmp.lt.u32.totalorder 1, 8
      %p378 = pneg %p377
      // Predicated region
      $region226: #{tpu_custom_call.1} parent=132 // pred_check
        _
      $region227: #{tpu_custom_call.1} parent=132 // pred_check_branch
        %380 = sbr.rel (%p377) target = $region229
      $region228: #{tpu_custom_call.1} parent=132 // pred_region
        %s395 = sand.u32 1, 7
        %p396 = scmp.eq.s32.totalorder %s395, 0
        %p397 = pneg %p396
        // Predicated region
        $region241: #{tpu_custom_call.1} parent=228 // pred_check
          _
        $region242: #{tpu_custom_call.1} parent=228 // pred_check_branch
          %399 = sbr.rel (%p396) target = $region244
        $region243: #{tpu_custom_call.1} parent=228 // pred_region
          %s400 = sand.u32 1, 7
          %s401 = ssub.s32 1, %s400
          %s402 = scalar_lea.vmem %s374, %s401
          %s403 = ssub.s32 1, %s400
          %s404 = scalar_lea.vmem %s375, %s403 [#allocation5]
          %s405 = sshllo.u32 0, %s400
          loop: start=0, step=1, limit=1
          $region245: #{tpu_custom_call.1} parent=243 // loop_pre_header
            _
          $region246: #{tpu_custom_call.1} parent=243 // loop_header
            %s407 = sphi 0, %s411
            %p408 = scmp.ge.s32.totalorder %s407, 1
            %s412 = sphi %s402, %s402
            %s413 = sphi %s404, %s404
          $region247: #{tpu_custom_call.1} parent=243 // loop_header_branch
            %410 = sbr.rel (%p408) target = $region251
          $region248: #{tpu_custom_call.1} parent=243 // loop_body
            %v414 = vld [vmem:[%s412] sm:%s405]
            %415 = vst [vmem:[%s413] sm:%s405] %v414
          $region249: #{tpu_custom_call.1} parent=243 // loop_footer
            %s411 = sadd.s32 1, %s407
          $region250: #{tpu_custom_call.1} parent=243 // loop_footer_branch
            %406 = sbr.rel target = $region246
          $region251: #{tpu_custom_call.1} parent=243 // loop_exit
            _
        $region244: #{tpu_custom_call.1} parent=228 // pred_fallthru
          _
      $region229: #{tpu_custom_call.1} parent=132 // pred_fallthru
        _
      // Predicated region
      $region230: #{tpu_custom_call.1} parent=132 // pred_check
        %p381 = pneg %p377
      $region231: #{tpu_custom_call.1} parent=132 // pred_check_branch
        %383 = sbr.rel (%p381) target = $region233
      $region232: #{tpu_custom_call.1} parent=132 // pred_region
        %s384 = sshllo.u32 0, 1
        loop: start=0, step=1, limit=1
        $region234: #{tpu_custom_call.1} parent=232 // loop_pre_header
          _
        $region235: #{tpu_custom_call.1} parent=232 // loop_header
          %s386 = sphi 0, %s390
          %p387 = scmp.ge.s32.totalorder %s386, 1
          %s391 = sphi %s374, %s374
          %s392 = sphi %s375, %s375
        $region236: #{tpu_custom_call.1} parent=232 // loop_header_branch
          %389 = sbr.rel (%p387) target = $region240
        $region237: #{tpu_custom_call.1} parent=232 // loop_body
          %v393 = vld [vmem:[%s391] sm:%s384]
          %394 = vst [vmem:[%s392] sm:%s384] %v393
        $region238: #{tpu_custom_call.1} parent=232 // loop_footer
          %s390 = sadd.s32 1, %s386
        $region239: #{tpu_custom_call.1} parent=232 // loop_footer_branch
          %385 = sbr.rel target = $region235
        $region240: #{tpu_custom_call.1} parent=232 // loop_exit
          _
      $region233: #{tpu_custom_call.1} parent=132 // pred_fallthru
        _
      // Predicated region
      $region252: #{tpu_custom_call.1} parent=132 // pred_check
        _
      $region253: #{tpu_custom_call.1} parent=132 // pred_check_branch
        %418 = sbr.rel (0) target = $region255
      $region254: #{tpu_custom_call.1} parent=132 // pred_region
        %419 = vsyncadd [#allocation6], 16
      $region255: #{tpu_custom_call.1} parent=132 // pred_fallthru
        _
    $region133: #{tpu_custom_call.1} parent=1 // loop_footer
      %s223 = sadd.s32 1, %s219
    $region134: #{tpu_custom_call.1} parent=1 // loop_footer_branch
      %218 = sbr.rel target = $region130
    $region135: #{tpu_custom_call.1} parent=1 // loop_exit
      _
    loop: start=0, step=1, limit=8
    $region256: #{tpu_custom_call.1} parent=1 // loop_pre_header
      _
    $region257: #{tpu_custom_call.1} parent=1 // loop_header
      %s421 = sphi 0, %s425
      %p422 = scmp.ge.s32.totalorder %s421, 8
    $region258: #{tpu_custom_call.1} parent=1 // loop_header_branch
      %424 = sbr.rel (%p422) target = $region262
    $region259: #{tpu_custom_call.1} parent=1 // loop_body
      %427 = dma.done [#allocation6], 16
      %429 = dma.done [#allocation6], 16
      %431 = dma.done [#allocation6], 16
      %433 = dma.done [#allocation6], 16
    $region260: #{tpu_custom_call.1} parent=1 // loop_footer
      %s425 = sadd.s32 1, %s421
    $region261: #{tpu_custom_call.1} parent=1 // loop_footer_branch
      %420 = sbr.rel target = $region257
    $region262: #{tpu_custom_call.1} parent=1 // loop_exit
      _
    %v434 = vld [vmem:[#allocation2] sm:$0xff]
    %v435 = vld [vmem:[#allocation2 + $0x8] sm:$0xff]
    %v436 = vld [vmem:[#allocation2 + $0x10] sm:$0xff]
    %v437 = vld [vmem:[#allocation2 + $0x18] sm:$0xff]
    %v438 = vld [vmem:[#allocation2 + $0x20] sm:$0xff]
    %v439 = vld [vmem:[#allocation2 + $0x28] sm:$0xff]
    %v440 = vld [vmem:[#allocation2 + $0x30] sm:$0xff]
    %v441 = vld [vmem:[#allocation2 + $0x38] sm:$0xff]
    %v442 = vld [vmem:[#allocation2 + $0x40] sm:$0xff]
    %v443 = vld [vmem:[#allocation2 + $0x48] sm:$0xff]
    %v444 = vld [vmem:[#allocation2 + $0x50] sm:$0xff]
    %v445 = vld [vmem:[#allocation2 + $0x58] sm:$0xff]
    %v446 = vld [vmem:[#allocation2 + $0x60] sm:$0xff]
    %v447 = vld [vmem:[#allocation2 + $0x68] sm:$0xff]
    %v448 = vld [vmem:[#allocation2 + $0x70] sm:$0xff]
    %v449 = vld [vmem:[#allocation2 + $0x78] sm:$0xff]
    %v450 = vld [vmem:[#allocation3] sm:$0xff]
    %v451 = vld [vmem:[#allocation3 + $0x8] sm:$0xff]
    %v452 = vld [vmem:[#allocation3 + $0x10] sm:$0xff]
    %v453 = vld [vmem:[#allocation3 + $0x18] sm:$0xff]
    %v454 = vld [vmem:[#allocation3 + $0x20] sm:$0xff]
    %v455 = vld [vmem:[#allocation3 + $0x28] sm:$0xff]
    %v456 = vld [vmem:[#allocation3 + $0x30] sm:$0xff]
    %v457 = vld [vmem:[#allocation3 + $0x38] sm:$0xff]
    %v458 = vld [vmem:[#allocation3 + $0x40] sm:$0xff]
    %v459 = vld [vmem:[#allocation3 + $0x48] sm:$0xff]
    %v460 = vld [vmem:[#allocation3 + $0x50] sm:$0xff]
    %v461 = vld [vmem:[#allocation3 + $0x58] sm:$0xff]
    %v462 = vld [vmem:[#allocation3 + $0x60] sm:$0xff]
    %v463 = vld [vmem:[#allocation3 + $0x68] sm:$0xff]
    %v464 = vld [vmem:[#allocation3 + $0x70] sm:$0xff]
    %v465 = vld [vmem:[#allocation3 + $0x78] sm:$0xff]
    %v466 = vmul.f32 %v434, %v450
    %v467 = vmul.f32 %v435, %v451
    %v468 = vmul.f32 %v436, %v452
    %v469 = vmul.f32 %v437, %v453
    %v470 = vmul.f32 %v438, %v454
    %v471 = vmul.f32 %v439, %v455
    %v472 = vmul.f32 %v440, %v456
    %v473 = vmul.f32 %v441, %v457
    %v474 = vmul.f32 %v442, %v458
    %v475 = vmul.f32 %v443, %v459
    %v476 = vmul.f32 %v444, %v460
    %v477 = vmul.f32 %v445, %v461
    %v478 = vmul.f32 %v446, %v462
    %v479 = vmul.f32 %v447, %v463
    %v480 = vmul.f32 %v448, %v464
    %v481 = vmul.f32 %v449, %v465
    %vm482 = vcmask 261120
    %v483 = vsel %vm482, %v466, 0.0
    %484 = vadd.xlane.f32.xlu0 %v483
    %v485 = vpop.xlane.xlu0 %484
    %v486 = vsel %vm482, %v467, 0.0
    %487 = vadd.xlane.f32.xlu0 %v486
    %v488 = vpop.xlane.xlu0 %487
    %v489 = vsel %vm482, %v468, 0.0
    %490 = vadd.xlane.f32.xlu0 %v489
    %v491 = vpop.xlane.xlu0 %490
    %v492 = vsel %vm482, %v469, 0.0
    %493 = vadd.xlane.f32.xlu0 %v492
    %v494 = vpop.xlane.xlu0 %493
    %v495 = vsel %vm482, %v470, 0.0
    %496 = vadd.xlane.f32.xlu0 %v495
    %v497 = vpop.xlane.xlu0 %496
    %v498 = vsel %vm482, %v471, 0.0
    %499 = vadd.xlane.f32.xlu0 %v498
    %v500 = vpop.xlane.xlu0 %499
    %v501 = vsel %vm482, %v472, 0.0
    %502 = vadd.xlane.f32.xlu0 %v501
    %v503 = vpop.xlane.xlu0 %502
    %v504 = vsel %vm482, %v473, 0.0
    %505 = vadd.xlane.f32.xlu0 %v504
    %v506 = vpop.xlane.xlu0 %505
    %v507 = vsel %vm482, %v474, 0.0
    %508 = vadd.xlane.f32.xlu0 %v507
    %v509 = vpop.xlane.xlu0 %508
    %v510 = vsel %vm482, %v475, 0.0
    %511 = vadd.xlane.f32.xlu0 %v510
    %v512 = vpop.xlane.xlu0 %511
    %v513 = vsel %vm482, %v476, 0.0
    %514 = vadd.xlane.f32.xlu0 %v513
    %v515 = vpop.xlane.xlu0 %514
    %v516 = vsel %vm482, %v477, 0.0
    %517 = vadd.xlane.f32.xlu0 %v516
    %v518 = vpop.xlane.xlu0 %517
    %v519 = vsel %vm482, %v478, 0.0
    %520 = vadd.xlane.f32.xlu0 %v519
    %v521 = vpop.xlane.xlu0 %520
    %v522 = vsel %vm482, %v479, 0.0
    %523 = vadd.xlane.f32.xlu0 %v522
    %v524 = vpop.xlane.xlu0 %523
    %v525 = vsel %vm482, %v480, 0.0
    %526 = vadd.xlane.f32.xlu0 %v525
    %v527 = vpop.xlane.xlu0 %526
    %v528 = vsel %vm482, %v481, 0.0
    %529 = vadd.xlane.f32.xlu0 %v528
    %v530 = vpop.xlane.xlu0 %529
    %v547 = vlaneseq
    %v548 = vand.u32 %v547, 127
    %v549 = vlaneseq
    %v550 = vshrl.u32 %v549, 7
    %v551 = vsub.s32 %v548, %v550
    %v552 = vrot.slane %v485, %v551
    %v553 = vadd.s32 %v548, 4294967288
    %v554 = vlaneseq
    %v555 = vshrl.u32 %v554, 7
    %v556 = vsub.s32 %v553, %v555
    %v557 = vrot.slane %v488, %v556
    %vm558 = vcmask 130112
    %v559 = vsel %vm558, %v557, %v552
    %v560 = vadd.s32 %v548, 4294967280
    %v561 = vlaneseq
    %v562 = vshrl.u32 %v561, 7
    %v563 = vsub.s32 %v560, %v562
    %v564 = vrot.slane %v491, %v563
    %vm565 = vcmask 195712
    %v566 = vsel %vm565, %v564, %v559
    %v567 = vadd.s32 %v548, 4294967272
    %v568 = vlaneseq
    %v569 = vshrl.u32 %v568, 7
    %v570 = vsub.s32 %v567, %v569
    %v571 = vrot.slane %v494, %v570
    %vm572 = vcmask 261312
    %v573 = vsel %vm572, %v571, %v566
    %v574 = vadd.s32 %v548, 4294967264
    %v575 = vlaneseq
    %v576 = vshrl.u32 %v575, 7
    %v577 = vsub.s32 %v574, %v576
    %v578 = vrot.slane %v497, %v577
    %vm579 = vcmask 326912
    %v580 = vsel %vm579, %v578, %v573
    %v581 = vadd.s32 %v548, 4294967256
    %v582 = vlaneseq
    %v583 = vshrl.u32 %v582, 7
    %v584 = vsub.s32 %v581, %v583
    %v585 = vrot.slane %v500, %v584
    %vm586 = vcmask 392512
    %v587 = vsel %vm586, %v585, %v580
    %v588 = vadd.s32 %v548, 4294967248
    %v589 = vlaneseq
    %v590 = vshrl.u32 %v589, 7
    %v591 = vsub.s32 %v588, %v590
    %v592 = vrot.slane %v503, %v591
    %vm593 = vcmask 458112
    %v594 = vsel %vm593, %v592, %v587
    %v595 = vadd.s32 %v548, 4294967240
    %v596 = vlaneseq
    %v597 = vshrl.u32 %v596, 7
    %v598 = vsub.s32 %v595, %v597
    %v599 = vrot.slane %v506, %v598
    %vm600 = vcmask 523712
    %v601 = vsel %vm600, %v599, %v594
    %v602 = vadd.s32 %v548, 4294967232
    %v603 = vlaneseq
    %v604 = vshrl.u32 %v603, 7
    %v605 = vsub.s32 %v602, %v604
    %v606 = vrot.slane %v509, %v605
    %vm607 = vcmask 589312
    %v608 = vsel %vm607, %v606, %v601
    %v609 = vadd.s32 %v548, 4294967224
    %v610 = vlaneseq
    %v611 = vshrl.u32 %v610, 7
    %v612 = vsub.s32 %v609, %v611
    %v613 = vrot.slane %v512, %v612
    %vm614 = vcmask 654912
    %v615 = vsel %vm614, %v613, %v608
    %v616 = vadd.s32 %v548, 4294967216
    %v617 = vlaneseq
    %v618 = vshrl.u32 %v617, 7
    %v619 = vsub.s32 %v616, %v618
    %v620 = vrot.slane %v515, %v619
    %vm621 = vcmask 720512
    %v622 = vsel %vm621, %v620, %v615
    %v623 = vadd.s32 %v548, 4294967208
    %v624 = vlaneseq
    %v625 = vshrl.u32 %v624, 7
    %v626 = vsub.s32 %v623, %v625
    %v627 = vrot.slane %v518, %v626
    %vm628 = vcmask 786112
    %v629 = vsel %vm628, %v627, %v622
    %v630 = vadd.s32 %v548, 4294967200
    %v631 = vlaneseq
    %v632 = vshrl.u32 %v631, 7
    %v633 = vsub.s32 %v630, %v632
    %v634 = vrot.slane %v521, %v633
    %vm635 = vcmask 851712
    %v636 = vsel %vm635, %v634, %v629
    %v637 = vadd.s32 %v548, 4294967192
    %v638 = vlaneseq
    %v639 = vshrl.u32 %v638, 7
    %v640 = vsub.s32 %v637, %v639
    %v641 = vrot.slane %v524, %v640
    %vm642 = vcmask 917312
    %v643 = vsel %vm642, %v641, %v636
    %v644 = vadd.s32 %v548, 4294967184
    %v645 = vlaneseq
    %v646 = vshrl.u32 %v645, 7
    %v647 = vsub.s32 %v644, %v646
    %v648 = vrot.slane %v527, %v647
    %vm649 = vcmask 982912
    %v650 = vsel %vm649, %v648, %v643
    %v651 = vadd.s32 %v548, 4294967176
    %v652 = vlaneseq
    %v653 = vshrl.u32 %v652, 7
    %v654 = vsub.s32 %v651, %v653
    %v655 = vrot.slane %v530, %v654
    %vm656 = vcmask 1048512
    %v657 = vsel %vm656, %v655, %v650
    %659 = vst [vmem:[#allocation10] sm:$0x1] %v657
    %v660 = vld [vmem:[#allocation4] sm:$0xff]
    %v661 = vld [vmem:[#allocation4 + $0x8] sm:$0xff]
    %v662 = vld [vmem:[#allocation4 + $0x10] sm:$0xff]
    %v663 = vld [vmem:[#allocation4 + $0x18] sm:$0xff]
    %v664 = vld [vmem:[#allocation4 + $0x20] sm:$0xff]
    %v665 = vld [vmem:[#allocation4 + $0x28] sm:$0xff]
    %v666 = vld [vmem:[#allocation4 + $0x30] sm:$0xff]
    %v667 = vld [vmem:[#allocation4 + $0x38] sm:$0xff]
    %v668 = vld [vmem:[#allocation4 + $0x40] sm:$0xff]
    %v669 = vld [vmem:[#allocation4 + $0x48] sm:$0xff]
    %v670 = vld [vmem:[#allocation4 + $0x50] sm:$0xff]
    %v671 = vld [vmem:[#allocation4 + $0x58] sm:$0xff]
    %v672 = vld [vmem:[#allocation4 + $0x60] sm:$0xff]
    %v673 = vld [vmem:[#allocation4 + $0x68] sm:$0xff]
    %v674 = vld [vmem:[#allocation4 + $0x70] sm:$0xff]
    %v675 = vld [vmem:[#allocation4 + $0x78] sm:$0xff]
    %v676 = vld [vmem:[#allocation5] sm:$0xff]
    %v677 = vld [vmem:[#allocation5 + $0x8] sm:$0xff]
    %v678 = vld [vmem:[#allocation5 + $0x10] sm:$0xff]
    %v679 = vld [vmem:[#allocation5 + $0x18] sm:$0xff]
    %v680 = vld [vmem:[#allocation5 + $0x20] sm:$0xff]
    %v681 = vld [vmem:[#allocation5 + $0x28] sm:$0xff]
    %v682 = vld [vmem:[#allocation5 + $0x30] sm:$0xff]
    %v683 = vld [vmem:[#allocation5 + $0x38] sm:$0xff]
    %v684 = vld [vmem:[#allocation5 + $0x40] sm:$0xff]
    %v685 = vld [vmem:[#allocation5 + $0x48] sm:$0xff]
    %v686 = vld [vmem:[#allocation5 + $0x50] sm:$0xff]
    %v687 = vld [vmem:[#allocation5 + $0x58] sm:$0xff]
    %v688 = vld [vmem:[#allocation5 + $0x60] sm:$0xff]
    %v689 = vld [vmem:[#allocation5 + $0x68] sm:$0xff]
    %v690 = vld [vmem:[#allocation5 + $0x70] sm:$0xff]
    %v691 = vld [vmem:[#allocation5 + $0x78] sm:$0xff]
    %v692 = vmul.f32 %v660, %v676
    %v693 = vmul.f32 %v661, %v677
    %v694 = vmul.f32 %v662, %v678
    %v695 = vmul.f32 %v663, %v679
    %v696 = vmul.f32 %v664, %v680
    %v697 = vmul.f32 %v665, %v681
    %v698 = vmul.f32 %v666, %v682
    %v699 = vmul.f32 %v667, %v683
    %v700 = vmul.f32 %v668, %v684
    %v701 = vmul.f32 %v669, %v685
    %v702 = vmul.f32 %v670, %v686
    %v703 = vmul.f32 %v671, %v687
    %v704 = vmul.f32 %v672, %v688
    %v705 = vmul.f32 %v673, %v689
    %v706 = vmul.f32 %v674, %v690
    %v707 = vmul.f32 %v675, %v691
    %v708 = vsel %vm482, %v692, 0.0
    %709 = vadd.xlane.f32.xlu0 %v708
    %v710 = vpop.xlane.xlu0 %709
    %v711 = vsel %vm482, %v693, 0.0
    %712 = vadd.xlane.f32.xlu0 %v711
    %v713 = vpop.xlane.xlu0 %712
    %v714 = vsel %vm482, %v694, 0.0
    %715 = vadd.xlane.f32.xlu0 %v714
    %v716 = vpop.xlane.xlu0 %715
    %v717 = vsel %vm482, %v695, 0.0
    %718 = vadd.xlane.f32.xlu0 %v717
    %v719 = vpop.xlane.xlu0 %718
    %v720 = vsel %vm482, %v696, 0.0
    %721 = vadd.xlane.f32.xlu0 %v720
    %v722 = vpop.xlane.xlu0 %721
    %v723 = vsel %vm482, %v697, 0.0
    %724 = vadd.xlane.f32.xlu0 %v723
    %v725 = vpop.xlane.xlu0 %724
    %v726 = vsel %vm482, %v698, 0.0
    %727 = vadd.xlane.f32.xlu0 %v726
    %v728 = vpop.xlane.xlu0 %727
    %v729 = vsel %vm482, %v699, 0.0
    %730 = vadd.xlane.f32.xlu0 %v729
    %v731 = vpop.xlane.xlu0 %730
    %v732 = vsel %vm482, %v700, 0.0
    %733 = vadd.xlane.f32.xlu0 %v732
    %v734 = vpop.xlane.xlu0 %733
    %v735 = vsel %vm482, %v701, 0.0
    %736 = vadd.xlane.f32.xlu0 %v735
    %v737 = vpop.xlane.xlu0 %736
    %v738 = vsel %vm482, %v702, 0.0
    %739 = vadd.xlane.f32.xlu0 %v738
    %v740 = vpop.xlane.xlu0 %739
    %v741 = vsel %vm482, %v703, 0.0
    %742 = vadd.xlane.f32.xlu0 %v741
    %v743 = vpop.xlane.xlu0 %742
    %v744 = vsel %vm482, %v704, 0.0
    %745 = vadd.xlane.f32.xlu0 %v744
    %v746 = vpop.xlane.xlu0 %745
    %v747 = vsel %vm482, %v705, 0.0
    %748 = vadd.xlane.f32.xlu0 %v747
    %v749 = vpop.xlane.xlu0 %748
    %v750 = vsel %vm482, %v706, 0.0
    %751 = vadd.xlane.f32.xlu0 %v750
    %v752 = vpop.xlane.xlu0 %751
    %v753 = vsel %vm482, %v707, 0.0
    %754 = vadd.xlane.f32.xlu0 %v753
    %v755 = vpop.xlane.xlu0 %754
    %v772 = vlaneseq
    %v773 = vshrl.u32 %v772, 7
    %v774 = vsub.s32 %v548, %v773
    %v775 = vrot.slane %v710, %v774
    %v776 = vlaneseq
    %v777 = vshrl.u32 %v776, 7
    %v778 = vsub.s32 %v553, %v777
    %v779 = vrot.slane %v713, %v778
    %v780 = vsel %vm558, %v779, %v775
    %v781 = vlaneseq
    %v782 = vshrl.u32 %v781, 7
    %v783 = vsub.s32 %v560, %v782
    %v784 = vrot.slane %v716, %v783
    %v785 = vsel %vm565, %v784, %v780
    %v786 = vlaneseq
    %v787 = vshrl.u32 %v786, 7
    %v788 = vsub.s32 %v567, %v787
    %v789 = vrot.slane %v719, %v788
    %v790 = vsel %vm572, %v789, %v785
    %v791 = vlaneseq
    %v792 = vshrl.u32 %v791, 7
    %v793 = vsub.s32 %v574, %v792
    %v794 = vrot.slane %v722, %v793
    %v795 = vsel %vm579, %v794, %v790
    %v796 = vlaneseq
    %v797 = vshrl.u32 %v796, 7
    %v798 = vsub.s32 %v581, %v797
    %v799 = vrot.slane %v725, %v798
    %v800 = vsel %vm586, %v799, %v795
    %v801 = vlaneseq
    %v802 = vshrl.u32 %v801, 7
    %v803 = vsub.s32 %v588, %v802
    %v804 = vrot.slane %v728, %v803
    %v805 = vsel %vm593, %v804, %v800
    %v806 = vlaneseq
    %v807 = vshrl.u32 %v806, 7
    %v808 = vsub.s32 %v595, %v807
    %v809 = vrot.slane %v731, %v808
    %v810 = vsel %vm600, %v809, %v805
    %v811 = vlaneseq
    %v812 = vshrl.u32 %v811, 7
    %v813 = vsub.s32 %v602, %v812
    %v814 = vrot.slane %v734, %v813
    %v815 = vsel %vm607, %v814, %v810
    %v816 = vlaneseq
    %v817 = vshrl.u32 %v816, 7
    %v818 = vsub.s32 %v609, %v817
    %v819 = vrot.slane %v737, %v818
    %v820 = vsel %vm614, %v819, %v815
    %v821 = vlaneseq
    %v822 = vshrl.u32 %v821, 7
    %v823 = vsub.s32 %v616, %v822
    %v824 = vrot.slane %v740, %v823
    %v825 = vsel %vm621, %v824, %v820
    %v826 = vlaneseq
    %v827 = vshrl.u32 %v826, 7
    %v828 = vsub.s32 %v623, %v827
    %v829 = vrot.slane %v743, %v828
    %v830 = vsel %vm628, %v829, %v825
    %v831 = vlaneseq
    %v832 = vshrl.u32 %v831, 7
    %v833 = vsub.s32 %v630, %v832
    %v834 = vrot.slane %v746, %v833
    %v835 = vsel %vm635, %v834, %v830
    %v836 = vlaneseq
    %v837 = vshrl.u32 %v836, 7
    %v838 = vsub.s32 %v637, %v837
    %v839 = vrot.slane %v749, %v838
    %v840 = vsel %vm642, %v839, %v835
    %v841 = vlaneseq
    %v842 = vshrl.u32 %v841, 7
    %v843 = vsub.s32 %v644, %v842
    %v844 = vrot.slane %v752, %v843
    %v845 = vsel %vm649, %v844, %v840
    %v846 = vlaneseq
    %v847 = vshrl.u32 %v846, 7
    %v848 = vsub.s32 %v651, %v847
    %v849 = vrot.slane %v755, %v848
    %v850 = vsel %vm656, %v849, %v845
    %852 = vst [vmem:[#allocation12] sm:$0x1] %v850
    // Predicated region
    $region263: #{tpu_custom_call.1} parent=1 // pred_check
      _
    $region264: #{tpu_custom_call.1} parent=1 // pred_check_branch
      %854 = sbr.rel (0) target = $region266
    $region265: #{tpu_custom_call.1} parent=1 // pred_region
      %s856 = ssub.s32 16, 16
      %857 = vsyncadd [#allocation11], %s856
      %s859 = sshll.u32 [#allocation10], 4
      %s860 = int_to_ptr.vmem [resolvable:$true] %s859
      %862 = dma.vmem_to_hbm [thread:$0]  %s860, 16, %s5, [#allocation11]
    $region266: #{tpu_custom_call.1} parent=1 // pred_fallthru
      _
    // Predicated region
    $region267: #{tpu_custom_call.1} parent=1 // pred_check
      _
    $region268: #{tpu_custom_call.1} parent=1 // pred_check_branch
      %864 = sbr.rel (0) target = $region270
    $region269: #{tpu_custom_call.1} parent=1 // pred_region
      %s866 = ssub.s32 16, 16
      %867 = vsyncadd [#allocation13], %s866
      %s869 = sshll.u32 [#allocation12], 4
      %s870 = int_to_ptr.vmem [resolvable:$true] %s869
      %872 = dma.vmem_to_hbm [thread:$0]  %s870, 16, %s6, [#allocation13]
    $region270: #{tpu_custom_call.1} parent=1 // pred_fallthru
      _
    // Predicated region
    $region271: #{tpu_custom_call.1} parent=1 // pred_check
      _
    $region272: #{tpu_custom_call.1} parent=1 // pred_check_branch
      %874 = sbr.rel (0) target = $region274
    $region273: #{tpu_custom_call.1} parent=1 // pred_region
      %875 = dma.done [#allocation11], 16
    $region274: #{tpu_custom_call.1} parent=1 // pred_fallthru
      _
    // Predicated region
    $region275: #{tpu_custom_call.1} parent=1 // pred_check
      _
    $region276: #{tpu_custom_call.1} parent=1 // pred_check_branch
      %877 = sbr.rel (0) target = $region278
    $region277: #{tpu_custom_call.1} parent=1 // pred_region
      %878 = dma.done [#allocation13], 16
    $region278: #{tpu_custom_call.1} parent=1 // pred_fallthru
      _
    %879 = vsyncpa [#allocation11], 1
    %880 = vsyncpa [#allocation13], 1
  %881 = vsyncmov [#allocation6]
  %s882 = vpop.sfrf %881
  %p883 = scmp.eq.s32.totalorder %s882, 0
  %p884 = pneg %p883
  %886 = shalt.err (%p884)

</llo_original>
